<compile_context>
chip_gen: v5e
topology: v5e:2x2
jax: 0.10.0
libtpu: 0.0.40
codegen_flags: <defaults>
</compile_context>

<pallas_src>
import numpy as np
import jax
import jax.numpy as jnp
from jax.experimental import pallas as pl
from jax.experimental.pallas import tpu as pltpu


# -------------- exact PyTorch operator matrices (host-side, one-time) --------

def adaptive_pool_matrix(out_size, in_size):
    # nn.AdaptiveAvgPool2d: bin i averages rows floor(i*I/O) .. ceil((i+1)*I/O)-1
    P = np.zeros((out_size, in_size), dtype=np.float32)
    for i in range(out_size):
        start = (i * in_size) // out_size
        end = -((-(i + 1) * in_size) // out_size)
        P[i, start:end] = 1.0 / (end - start)
    return P


def bilinear_up_matrix(out_size, in_size):
    # F.interpolate(mode='bilinear', align_corners=True) along one axis.
    U = np.zeros((out_size, in_size), dtype=np.float32)
    if in_size == 1:
        U[:, 0] = 1.0
        return U
    scale = (in_size - 1) / (out_size - 1)
    for h in range(out_size):
        src = h * scale
        i0 = min(int(np.floor(src)), in_size - 1)
        i1 = min(i0 + 1, in_size - 1)
        frac = src - i0
        U[h, i0] += 1.0 - frac
        U[h, i1] += frac
    return U


def conv3x3_tap_masks(H, W):
    # masks[t, p] = 1 iff neighbour p + off_t of output position p is a real
    # (non-padding) pixel, where t = dy*3+dx and off_t = (dy-1)*W + (dx-1).
    masks = np.zeros((9, H * W), dtype=np.float32)
    hh, ww = np.divmod(np.arange(H * W), W)
    for dy in range(3):
        for dx in range(3):
            ok = ((hh + dy - 1 >= 0) & (hh + dy - 1 < H) &
                  (ww + dx - 1 >= 0) & (ww + dx - 1 < W))
            masks[dy * 3 + dx] = ok.astype(np.float32)
    return masks


def build_branch_operators(H, W, bins, branches):
    # Stack the pyramid branches into single transposed operator matrices so
    # the whole pyramid is 3 matmuls with the spatial axis (H*W) on lanes.
    HW = H * W
    sizes = [b * b for b in bins]
    off = np.concatenate([[0], np.cumsum(sizes)])
    BB = int(off[-1])
    BBp = max(128, ((BB + 127) // 128) * 128)        # lane-dense pooled axis
    Cin, Cr = np.asarray(branches[0]["w"]).shape
    Crtot = Cr * len(bins)

    w1T = np.zeros((Crtot, Cin), np.float32)         # stacked (transposed) 1x1 weights
    poolT = np.zeros((HW, BBp), np.float32)          # pooled = XW @ poolT
    upT = np.zeros((BBp, HW), np.float32)            # up = Y @ upT
    scT = np.zeros((Crtot, BBp), np.float32)         # block-diagonal fused BN scale
    biT = np.zeros((Crtot, BBp), np.float32)         # block-diagonal fused BN bias
    for k, b in enumerate(bins):
        pk = np.kron(adaptive_pool_matrix(b, H), adaptive_pool_matrix(b, W))
        uk = np.kron(bilinear_up_matrix(H, b), bilinear_up_matrix(W, b))
        r0, r1 = int(off[k]), int(off[k + 1])
        c0, c1 = k * Cr, (k + 1) * Cr
        poolT[:, r0:r1] = pk.T
        upT[r0:r1, :] = uk.T
        w1T[c0:c1, :] = np.asarray(branches[k]["w"], np.float32).T
        scT[c0:c1, r0:r1] = np.asarray(branches[k]["scale"], np.float32)[:, None]
        biT[c0:c1, r0:r1] = np.asarray(branches[k]["bias"], np.float32)[:, None]
    return w1T, poolT, scT, biT, upT


def prepare_ppm(params, bins, H, W):
    """One-time host-side packing of all operator matrices (hoisted out of the
    per-forward path, per review)."""
    branches = params["branches"]
    Cin, Cr = np.asarray(branches[0]["w"]).shape
    Crtot = Cr * len(bins)
    Cc = int(Cin + Crtot)
    m = params["merge"]
    Co = int(np.asarray(m["w"]).shape[-1])

    w1T, poolT, scT, biT, upT = build_branch_operators(H, W, bins, branches)
    masks = conv3x3_tap_masks(H, W)
    # Fold merge BN scale into the 3x3 weight: relu((sW)x + b) == relu(s(Wx)+b).
    w3 = np.asarray(m["w"], np.float32).reshape(9 * Cc, Co)
    w3 = w3 * np.asarray(m["scale"], np.float32)[None, :]
    return {
        "w1T": jnp.asarray(w1T, jnp.bfloat16),
        "poolT": jnp.asarray(poolT, jnp.bfloat16),
        "scT": jnp.asarray(scT, jnp.float32),
        "biT": jnp.asarray(biT, jnp.float32),
        "upT": jnp.asarray(upT, jnp.bfloat16),
        "masks": jnp.asarray(masks, jnp.float32),
        "w3T": jnp.asarray(w3.T, jnp.bfloat16),                   # (Co, 9*Cc)
        "mbi": jnp.asarray(np.asarray(m["bias"], np.float32).reshape(Co, 1)),
        "dims": dict(H=H, W=W, Cin=int(Cin), Crtot=int(Crtot), Cc=Cc, Co=Co,
                     BBp=int(poolT.shape[1])),
    }


# ------------------------------ fused Pallas kernel ---------------------------

def _make_ppm_kernel(H, W, Cin, Crtot, co_tile, co_sub):
    HW = H * W
    Cc = Cin + Crtot

    def kernel(x_ref, w1t_ref, poolT_ref, scT_ref, biT_ref, upT_ref, mask_ref,
               w3t_ref, mbi_ref, o_ref, col_ref):
        # x_ref    : (1, Cin, HW)   one batch element, spatial on lanes (f32)
        # w1t_ref  : (Crtot, Cin)   stacked transposed 1x1 conv weights (bf16)
        # poolT_ref: (HW, BBp)      stacked adaptive-avg-pool matrix (bf16)
        # scT/biT  : (Crtot, BBp)   block-diagonal fused BN scale / bias (f32)
        # upT_ref  : (BBp, HW)      stacked bilinear-upsample matrix (bf16)
        # mask_ref : (9, HW)        3x3 zero-padding validity masks (f32)
        # w3t_ref  : (Co, 9*Cc)     merge weights, BN scale folded in (bf16, resident)
        # mbi_ref  : (Co, 1)        merge fused BN bias (f32, resident)
        # o_ref    : (1, co_tile, HW)  f32 output tile
        # col_ref  : (9*Cc, HW)     bf16 im2col scratch, persists across Co tiles
        j = pl.program_id(1)

        # NOTE: the j (Co-tile) axis must stay sequential on ONE core
        # ("arbitrary"): col_ref is built only at j == 0 and reused afterwards.
        @pl.when(j == 0)
        def _build_columns():                          # once per batch element
            xt = x_ref[0]                                                  # (Cin, HW) f32
            # Pyramid (all branches stacked): Conv1x1 -> AdaptiveAvgPool ->
            # BN+ReLU (block-diagonal) -> bilinear up.  bf16 MXU, f32 accum.
            xw = jnp.dot(w1t_ref[...], xt.astype(jnp.bfloat16),
                         preferred_element_type=jnp.float32)               # (Crtot, HW)
            pooled = jnp.dot(xw.astype(jnp.bfloat16), poolT_ref[...],
                             preferred_element_type=jnp.float32)           # (Crtot, BBp)
            y = jnp.maximum(pooled * scT_ref[...] + biT_ref[...], 0.0)     # BN + ReLU
            up = jnp.dot(y.astype(jnp.bfloat16), upT_ref[...],
                         preferred_element_type=jnp.float32)               # (Crtot, HW)
            # Lane-dense im2col written straight into the bf16 scratch:
            # XLU rolls + zero-padding masks, no intermediate `cat` buffer.
            for t in range(9):
                dy, dx = divmod(t, 3)
                off = (dy - 1) * W + (dx - 1)
                r0 = t * Cc
                if off == 0:                           # center tap: no shift, no mask
                    col_ref[r0:r0 + Cin, :] = xt.astype(jnp.bfloat16)
                    col_ref[r0 + Cin:r0 + Cc, :] = up.astype(jnp.bfloat16)
                else:
                    shift = (-off) % HW                # result[p] = src[(p + off) % HW]
                    msk = mask_ref[t:t + 1, :]         # (1, HW)
                    col_ref[r0:r0 + Cin, :] = (
                        pltpu.roll(xt, shift, axis=1) * msk).astype(jnp.bfloat16)
                    col_ref[r0 + Cin:r0 + Cc, :] = (
                        pltpu.roll(up, shift, axis=1) * msk).astype(jnp.bfloat16)

        # Merge Conv3x3 + BN + ReLU for this Co tile: K = 9*Cc bf16 matmuls,
        # sub-chunked over output channels to bound f32 vreg pressure.
        for s in range(co_tile // co_sub):
            row = pl.multiple_of(j * co_tile + s * co_sub, co_sub)
            w3 = w3t_ref[pl.ds(row, co_sub), :]                 # (co_sub, 9*Cc) bf16
            bias = mbi_ref[pl.ds(row, co_sub), :]               # (co_sub, 1) f32
            out = jnp.dot(w3, col_ref[...],
                          preferred_element_type=jnp.float32)   # (co_sub, HW) f32
            o_ref[0, s * co_sub:(s + 1) * co_sub, :] = jnp.maximum(out + bias, 0.0)

    return kernel


def ppm_forward(x, packed, co_tile=256):
    # x: (B, Cin, H, W) float32, NCHW (PyTorch layout).
    d = packed["dims"]
    H, W, Cin, Crtot = d["H"], d["W"], d["Cin"], d["Crtot"]
    Cc, Co, BBp = d["Cc"], d["Co"], d["BBp"]
    B = x.shape[0]
    HW = H * W
    co_tile = min(co_tile, Co)
    co_sub = min(128, co_tile)
    assert Co % co_tile == 0 and co_tile % co_sub == 0
    assert HW % 128 == 0 and Cin % 8 == 0
    # TODO(synk): HW tiling (halo-aware) + per-tap accumulation for production
    # PSPNet sizes where HW % 128 != 0 or the (9*Cc, HW) im2col exceeds VMEM.

    x_flat = x.reshape(B, Cin, HW).astype(jnp.float32)

    flops = 2 * B * (Crtot * Cin * HW + Crtot * HW * BBp + Crtot * BBp * HW
                     + Co * 9 * Cc * HW)
    bytes_accessed = (x_flat.size * 4 + B * Co * HW * 4
                      + packed["w3T"].size * 2
                      + (packed["poolT"].size + packed["upT"].size
                         + packed["w1T"].size) * 2
                      + (packed["scT"].size + packed["biT"].size
                         + packed["masks"].size + packed["mbi"].size) * 4)

    out_flat = pl.pallas_call(
        _make_ppm_kernel(H, W, Cin, Crtot, co_tile, co_sub),
        out_shape=jax.ShapeDtypeStruct((B, Co, HW), jnp.float32),
        grid=(B, Co // co_tile),
        in_specs=[
            pl.BlockSpec((1, Cin, HW), lambda b, j: (b, 0, 0)),      # x
            pl.BlockSpec((Crtot, Cin), lambda b, j: (0, 0)),         # stacked w1^T
            pl.BlockSpec((HW, BBp), lambda b, j: (0, 0)),            # pool^T
            pl.BlockSpec((Crtot, BBp), lambda b, j: (0, 0)),         # BN scale (blkdiag)
            pl.BlockSpec((Crtot, BBp), lambda b, j: (0, 0)),         # BN bias  (blkdiag)
            pl.BlockSpec((BBp, HW), lambda b, j: (0, 0)),            # up^T
            pl.BlockSpec((9, HW), lambda b, j: (0, 0)),              # conv tap masks
            pl.BlockSpec((Co, 9 * Cc), lambda b, j: (0, 0)),         # merge W (resident)
            pl.BlockSpec((Co, 1), lambda b, j: (0, 0)),              # merge bias (resident)
        ],
        out_specs=pl.BlockSpec((1, co_tile, HW), lambda b, j: (b, j, 0)),
        scratch_shapes=[pltpu.VMEM((9 * Cc, HW), jnp.bfloat16)],
        compiler_params=pltpu.CompilerParams(
            dimension_semantics=("parallel", "arbitrary")),
        cost_estimate=pl.CostEstimate(flops=int(flops), transcendentals=0,
                                      bytes_accessed=int(bytes_accessed)),
    )(x_flat, packed["w1T"], packed["poolT"], packed["scT"], packed["biT"],
      packed["upT"], packed["masks"], packed["w3T"], packed["mbi"])
    return out_flat.reshape(B, Co, H, W)          # Dropout2d(p=0.1): identity (eval)


# ------------------------------ pure-JAX reference ----------------------------

def ppm_reference(x, params, bins):
    # PyTorch PPM semantics (NCHW, eval-mode BN), f32 throughout, for validation.
    B, Cin, H, W = x.shape
    HW = H * W
    xf = x.reshape(B, Cin, HW)
    outs = [xf]
    for k, b in enumerate(bins):
        p = params["branches"][k]
        pool = jnp.asarray(np.kron(adaptive_pool_matrix(b, H),
                                   adaptive_pool_matrix(b, W)))    # (b*b, HW)
        up = jnp.asarray(np.kron(bilinear_up_matrix(H, b),
                                 bilinear_up_matrix(W, b)))        # (HW, b*b)
        pooled = jnp.einsum("ps,bcs->bcp", pool, xf)               # AdaptiveAvgPool2d
        y = jnp.einsum("bcp,cr->brp", pooled, p["w"])              # Conv1x1
        y = jnp.maximum(y * p["scale"][None, :, None] + p["bias"][None, :, None], 0.0)
        outs.append(jnp.einsum("sp,brp->brs", up, y))              # bilinear upsample
    cat = jnp.concatenate(outs, axis=1).reshape(B, -1, H, W)
    cat_pad = jnp.pad(cat, ((0, 0), (0, 0), (1, 1), (1, 1)))
    m = params["merge"]
    Co = m["w"].shape[-1]
    acc = jnp.zeros((B, Co, H, W), jnp.float32)
    for dy in range(3):
        for dx in range(3):
            acc = acc + jnp.einsum("bchw,co->bohw",
                                   cat_pad[:, :, dy:dy + H, dx:dx + W], m["w"][dy, dx])
    return jnp.maximum(acc * m["scale"][None, :, None, None]
                       + m["bias"][None, :, None, None], 0.0)


# ------------------------------------ main ------------------------------------

if __name__ == "__main__":
    B, Cin, H, W = 2, 16, 16, 16
    bins = (1, 2, 3, 6)
    Cr = Cin // len(bins)          # reduction_dim -> concat channels = 2*Cin
    Co = 512                       # hard-coded in the module's merge conv
    eps = 1e-5

    key = jax.random.PRNGKey(0)
    keys = jax.random.split(key, 12)
    x = jax.random.normal(keys[0], (B, Cin, H, W), jnp.float32)

    def fused_bn(k, c):
        kg, kb, km, kv = jax.random.split(k, 4)
        gamma = 1.0 + 0.1 * jax.random.normal(kg, (c,), jnp.float32)
        beta = 0.1 * jax.random.normal(kb, (c,), jnp.float32)
        mean = 0.1 * jax.random.normal(km, (c,), jnp.float32)
        var = 1.0 + 0.1 * jnp.abs(jax.random.normal(kv, (c,), jnp.float32))
        scale = gamma / jnp.sqrt(var + eps)
        bias = beta - mean * scale
        return scale, bias

    branches = []
    for i in range(len(bins)):
        kw, kbn = jax.random.split(keys[1 + i], 2)
        w1 = 0.1 * jax.random.normal(kw, (Cin, Cr), jnp.float32)
        s, b = fused_bn(kbn, Cr)
        branches.append({"w": w1, "scale": s, "bias": b})

    kw, kbn = jax.random.split(keys[10], 2)
    w3 = 0.05 * jax.random.normal(kw, (3, 3, 2 * Cin, Co), jnp.float32)
    ms, mb = fused_bn(kbn, Co)
    params = {"branches": branches, "merge": {"w": w3, "scale": ms, "bias": mb}}

    packed = prepare_ppm(params, bins, H, W)   # one-time host-side packing
    out = jax.block_until_ready(ppm_forward(x, packed, co_tile=256))
    assert out.shape == (B, Co, H, W)
    ref = jax.block_until_ready(ppm_reference(x, params, bins))
    # bf16 MXU operands with f32 accumulation: re-baselined tolerance vs f32 ref.
    np.testing.assert_allclose(np.asarray(out), np.asarray(ref), rtol=6e-2, atol=6e-2)
    print("KERNEL_OK")
</pallas_src>

<mosaic_0001>
module attributes {stable_mosaic.version = 11 : i64} {
  func.func @kernel(%arg0: i32, %arg1: i32, %arg2: memref<1x16x256xf32, #tpu.memory_space<vmem>>, %arg3: memref<16x16xbf16, #tpu.memory_space<vmem>>, %arg4: memref<256x128xbf16, #tpu.memory_space<vmem>>, %arg5: memref<16x128xf32, #tpu.memory_space<vmem>>, %arg6: memref<16x128xf32, #tpu.memory_space<vmem>>, %arg7: memref<128x256xbf16, #tpu.memory_space<vmem>>, %arg8: memref<9x256xf32, #tpu.memory_space<vmem>>, %arg9: memref<512x288xbf16, #tpu.memory_space<vmem>>, %arg10: memref<512x1xf32, #tpu.memory_space<vmem>>, %arg11: memref<1x256x256xf32, #tpu.memory_space<vmem>>, %arg12: memref<288x256xbf16, #tpu.memory_space<vmem>>) attributes {dimension_semantics = [#tpu.dimension_semantics<parallel>, #tpu.dimension_semantics<arbitrary>], iteration_bounds = array<i64: 2, 2>, scalar_prefetch = 0 : i64, scratch_operands = 1 : i64, tpu.core_type = #tpu.core_type<tc>, window_params = [{transform_indices = @transform_0, window_bounds = array<i64: 1, 16, 256>}, {pipeline_mode = #tpu.pipeline_mode<synchronous>, transform_indices = @transform_1, window_bounds = array<i64: 16, 16>}, {pipeline_mode = #tpu.pipeline_mode<synchronous>, transform_indices = @transform_2, window_bounds = array<i64: 256, 128>}, {pipeline_mode = #tpu.pipeline_mode<synchronous>, transform_indices = @transform_3, window_bounds = array<i64: 16, 128>}, {pipeline_mode = #tpu.pipeline_mode<synchronous>, transform_indices = @transform_4, window_bounds = array<i64: 16, 128>}, {pipeline_mode = #tpu.pipeline_mode<synchronous>, transform_indices = @transform_5, window_bounds = array<i64: 128, 256>}, {pipeline_mode = #tpu.pipeline_mode<synchronous>, transform_indices = @transform_6, window_bounds = array<i64: 9, 256>}, {pipeline_mode = #tpu.pipeline_mode<synchronous>, transform_indices = @transform_7, window_bounds = array<i64: 512, 288>}, {pipeline_mode = #tpu.pipeline_mode<synchronous>, transform_indices = @transform_8, window_bounds = array<i64: 512, 1>}, {transform_indices = @transform_9, window_bounds = array<i64: 1, 256, 256>}]} {
    %c0_i32 = arith.constant 0 : i32
    %0 = arith.cmpi eq, %arg1, %c0_i32 : i32
    %1 = arith.extui %0 : i1 to i32
    %c0_i32_0 = arith.constant 0 : i32
    %2 = arith.cmpi ne, %1, %c0_i32_0 : i32
    scf.if %2 {
      %c0_18 = arith.constant 0 : index
      %c0_19 = arith.constant 0 : index
      %c0_20 = arith.constant 0 : index
      %35 = vector.load %arg2[%c0_18, %c0_19, %c0_20] : memref<1x16x256xf32, #tpu.memory_space<vmem>>, vector<1x16x256xf32>
      %36 = vector.shape_cast %35 : vector<1x16x256xf32> to vector<16x256xf32>
      %c0_21 = arith.constant 0 : index
      %c0_22 = arith.constant 0 : index
      %37 = vector.load %arg3[%c0_21, %c0_22] : memref<16x16xbf16, #tpu.memory_space<vmem>>, vector<16x16xbf16>
      %38 = arith.truncf %36 : vector<16x256xf32> to vector<16x256xbf16>
      %cst_23 = arith.constant dense<0.000000e+00> : vector<16x256xf32>
      %39 = tpu.matmul %37, %38, %cst_23 {dimension_numbers = #tpu.dot_dimension_numbers<[1], [0], [0], [1], [0, 0, 1, 1], [], []>} : vector<16x16xbf16>, vector<16x256xbf16>, vector<16x256xf32> -> vector<16x256xf32>
      %40 = arith.truncf %39 : vector<16x256xf32> to vector<16x256xbf16>
      %c0_24 = arith.constant 0 : index
      %c0_25 = arith.constant 0 : index
      %41 = vector.load %arg4[%c0_24, %c0_25] : memref<256x128xbf16, #tpu.memory_space<vmem>>, vector<256x128xbf16>
      %cst_26 = arith.constant dense<0.000000e+00> : vector<16x128xf32>
      %42 = tpu.matmul %40, %41, %cst_26 {dimension_numbers = #tpu.dot_dimension_numbers<[1], [0], [0], [1], [0, 0, 1, 1], [], []>} : vector<16x256xbf16>, vector<256x128xbf16>, vector<16x128xf32> -> vector<16x128xf32>
      %c0_27 = arith.constant 0 : index
      %c0_28 = arith.constant 0 : index
      %43 = vector.load %arg5[%c0_27, %c0_28] : memref<16x128xf32, #tpu.memory_space<vmem>>, vector<16x128xf32>
      %44 = arith.mulf %42, %43 : vector<16x128xf32>
      %c0_29 = arith.constant 0 : index
      %c0_30 = arith.constant 0 : index
      %45 = vector.load %arg6[%c0_29, %c0_30] : memref<16x128xf32, #tpu.memory_space<vmem>>, vector<16x128xf32>
      %46 = arith.addf %44, %45 : vector<16x128xf32>
      %cst_31 = arith.constant 0.000000e+00 : f32
      %47 = vector.broadcast %cst_31 : f32 to vector<16x128xf32>
      %48 = arith.maximumf %46, %47 : vector<16x128xf32>
      %49 = arith.truncf %48 : vector<16x128xf32> to vector<16x128xbf16>
      %c0_32 = arith.constant 0 : index
      %c0_33 = arith.constant 0 : index
      %50 = vector.load %arg7[%c0_32, %c0_33] : memref<128x256xbf16, #tpu.memory_space<vmem>>, vector<128x256xbf16>
      %cst_34 = arith.constant dense<0.000000e+00> : vector<16x256xf32>
      %51 = tpu.matmul %49, %50, %cst_34 {dimension_numbers = #tpu.dot_dimension_numbers<[1], [0], [0], [1], [0, 0, 1, 1], [], []>} : vector<16x128xbf16>, vector<128x256xbf16>, vector<16x256xf32> -> vector<16x256xf32>
      %c0_35 = arith.constant 0 : index
      %c0_36 = arith.constant 0 : index
      %52 = vector.load %arg8[%c0_35, %c0_36] : memref<9x256xf32, #tpu.memory_space<vmem>>, vector<1x256xf32>
      %c17_i32 = arith.constant 17 : i32
      %53 = tpu.dynamic_rotate %36 by %c17_i32 dim 1 : vector<16x256xf32>, i32 -> vector<16x256xf32>
      %54 = vector.broadcast %52 : vector<1x256xf32> to vector<16x256xf32>
      %55 = arith.mulf %53, %54 : vector<16x256xf32>
      %56 = arith.truncf %55 : vector<16x256xf32> to vector<16x256xbf16>
      %c0_37 = arith.constant 0 : index
      %c0_38 = arith.constant 0 : index
      %57 = vector.load %arg12[%c0_37, %c0_38] : memref<288x256xbf16, #tpu.memory_space<vmem>>, vector<16x256xbf16>
      tpu.vector_store %arg12[%c0_37, %c0_38], %56 {strides = array<i32>} : memref<288x256xbf16, #tpu.memory_space<vmem>>, vector<16x256xbf16>,
      %c17_i32_39 = arith.constant 17 : i32
      %58 = tpu.dynamic_rotate %51 by %c17_i32_39 dim 1 : vector<16x256xf32>, i32 -> vector<16x256xf32>
      %59 = vector.broadcast %52 : vector<1x256xf32> to vector<16x256xf32>
      %60 = arith.mulf %58, %59 : vector<16x256xf32>
      %61 = arith.truncf %60 : vector<16x256xf32> to vector<16x256xbf16>
      %c16 = arith.constant 16 : index
      %c0_40 = arith.constant 0 : index
      %62 = vector.load %arg12[%c16, %c0_40] : memref<288x256xbf16, #tpu.memory_space<vmem>>, vector<16x256xbf16>
      tpu.vector_store %arg12[%c16, %c0_40], %61 {strides = array<i32>} : memref<288x256xbf16, #tpu.memory_space<vmem>>, vector<16x256xbf16>,
      %c1 = arith.constant 1 : index
      %c0_41 = arith.constant 0 : index
      %63 = vector.load %arg8[%c1, %c0_41] : memref<9x256xf32, #tpu.memory_space<vmem>>, vector<1x256xf32>
      %c16_i32 = arith.constant 16 : i32
      %64 = tpu.dynamic_rotate %36 by %c16_i32 dim 1 : vector<16x256xf32>, i32 -> vector<16x256xf32>
      %65 = vector.broadcast %63 : vector<1x256xf32> to vector<16x256xf32>
      %66 = arith.mulf %64, %65 : vector<16x256xf32>
      %67 = arith.truncf %66 : vector<16x256xf32> to vector<16x256xbf16>
      %c32 = arith.constant 32 : index
      %c0_42 = arith.constant 0 : index
      %68 = vector.load %arg12[%c32, %c0_42] : memref<288x256xbf16, #tpu.memory_space<vmem>>, vector<16x256xbf16>
      tpu.vector_store %arg12[%c32, %c0_42], %67 {strides = array<i32>} : memref<288x256xbf16, #tpu.memory_space<vmem>>, vector<16x256xbf16>,
      %c16_i32_43 = arith.constant 16 : i32
      %69 = tpu.dynamic_rotate %51 by %c16_i32_43 dim 1 : vector<16x256xf32>, i32 -> vector<16x256xf32>
      %70 = vector.broadcast %63 : vector<1x256xf32> to vector<16x256xf32>
      %71 = arith.mulf %69, %70 : vector<16x256xf32>
      %72 = arith.truncf %71 : vector<16x256xf32> to vector<16x256xbf16>
      %c48 = arith.constant 48 : index
      %c0_44 = arith.constant 0 : index
      %73 = vector.load %arg12[%c48, %c0_44] : memref<288x256xbf16, #tpu.memory_space<vmem>>, vector<16x256xbf16>
      tpu.vector_store %arg12[%c48, %c0_44], %72 {strides = array<i32>} : memref<288x256xbf16, #tpu.memory_space<vmem>>, vector<16x256xbf16>,
      %c2 = arith.constant 2 : index
      %c0_45 = arith.constant 0 : index
      %74 = vector.load %arg8[%c2, %c0_45] : memref<9x256xf32, #tpu.memory_space<vmem>>, vector<1x256xf32>
      %c15_i32 = arith.constant 15 : i32
      %75 = tpu.dynamic_rotate %36 by %c15_i32 dim 1 : vector<16x256xf32>, i32 -> vector<16x256xf32>
      %76 = vector.broadcast %74 : vector<1x256xf32> to vector<16x256xf32>
      %77 = arith.mulf %75, %76 : vector<16x256xf32>
      %78 = arith.truncf %77 : vector<16x256xf32> to vector<16x256xbf16>
      %c64 = arith.constant 64 : index
      %c0_46 = arith.constant 0 : index
      %79 = vector.load %arg12[%c64, %c0_46] : memref<288x256xbf16, #tpu.memory_space<vmem>>, vector<16x256xbf16>
      tpu.vector_store %arg12[%c64, %c0_46], %78 {strides = array<i32>} : memref<288x256xbf16, #tpu.memory_space<vmem>>, vector<16x256xbf16>,
      %c15_i32_47 = arith.constant 15 : i32
      %80 = tpu.dynamic_rotate %51 by %c15_i32_47 dim 1 : vector<16x256xf32>, i32 -> vector<16x256xf32>
      %81 = vector.broadcast %74 : vector<1x256xf32> to vector<16x256xf32>
      %82 = arith.mulf %80, %81 : vector<16x256xf32>
      %83 = arith.truncf %82 : vector<16x256xf32> to vector<16x256xbf16>
      %c80 = arith.constant 80 : index
      %c0_48 = arith.constant 0 : index
      %84 = vector.load %arg12[%c80, %c0_48] : memref<288x256xbf16, #tpu.memory_space<vmem>>, vector<16x256xbf16>
      tpu.vector_store %arg12[%c80, %c0_48], %83 {strides = array<i32>} : memref<288x256xbf16, #tpu.memory_space<vmem>>, vector<16x256xbf16>,
      %c3 = arith.constant 3 : index
      %c0_49 = arith.constant 0 : index
      %85 = vector.load %arg8[%c3, %c0_49] : memref<9x256xf32, #tpu.memory_space<vmem>>, vector<1x256xf32>
      %c1_i32 = arith.constant 1 : i32
      %86 = tpu.dynamic_rotate %36 by %c1_i32 dim 1 : vector<16x256xf32>, i32 -> vector<16x256xf32>
      %87 = vector.broadcast %85 : vector<1x256xf32> to vector<16x256xf32>
      %88 = arith.mulf %86, %87 : vector<16x256xf32>
      %89 = arith.truncf %88 : vector<16x256xf32> to vector<16x256xbf16>
      %c96 = arith.constant 96 : index
      %c0_50 = arith.constant 0 : index
      %90 = vector.load %arg12[%c96, %c0_50] : memref<288x256xbf16, #tpu.memory_space<vmem>>, vector<16x256xbf16>
      tpu.vector_store %arg12[%c96, %c0_50], %89 {strides = array<i32>} : memref<288x256xbf16, #tpu.memory_space<vmem>>, vector<16x256xbf16>,
      %c1_i32_51 = arith.constant 1 : i32
      %91 = tpu.dynamic_rotate %51 by %c1_i32_51 dim 1 : vector<16x256xf32>, i32 -> vector<16x256xf32>
      %92 = vector.broadcast %85 : vector<1x256xf32> to vector<16x256xf32>
      %93 = arith.mulf %91, %92 : vector<16x256xf32>
      %94 = arith.truncf %93 : vector<16x256xf32> to vector<16x256xbf16>
      %c112 = arith.constant 112 : index
      %c0_52 = arith.constant 0 : index
      %95 = vector.load %arg12[%c112, %c0_52] : memref<288x256xbf16, #tpu.memory_space<vmem>>, vector<16x256xbf16>
      tpu.vector_store %arg12[%c112, %c0_52], %94 {strides = array<i32>} : memref<288x256xbf16, #tpu.memory_space<vmem>>, vector<16x256xbf16>,
      %96 = arith.truncf %36 : vector<16x256xf32> to vector<16x256xbf16>
      %c128_53 = arith.constant 128 : index
      %c0_54 = arith.constant 0 : index
      %97 = vector.load %arg12[%c128_53, %c0_54] : memref<288x256xbf16, #tpu.memory_space<vmem>>, vector<16x256xbf16>
      tpu.vector_store %arg12[%c128_53, %c0_54], %96 {strides = array<i32>} : memref<288x256xbf16, #tpu.memory_space<vmem>>, vector<16x256xbf16>,
      %98 = arith.truncf %51 : vector<16x256xf32> to vector<16x256xbf16>
      %c144 = arith.constant 144 : index
      %c0_55 = arith.constant 0 : index
      %99 = vector.load %arg12[%c144, %c0_55] : memref<288x256xbf16, #tpu.memory_space<vmem>>, vector<16x256xbf16>
      tpu.vector_store %arg12[%c144, %c0_55], %98 {strides = array<i32>} : memref<288x256xbf16, #tpu.memory_space<vmem>>, vector<16x256xbf16>,
      %c5 = arith.constant 5 : index
      %c0_56 = arith.constant 0 : index
      %100 = vector.load %arg8[%c5, %c0_56] : memref<9x256xf32, #tpu.memory_space<vmem>>, vector<1x256xf32>
      %c255_i32 = arith.constant 255 : i32
      %101 = tpu.dynamic_rotate %36 by %c255_i32 dim 1 : vector<16x256xf32>, i32 -> vector<16x256xf32>
      %102 = vector.broadcast %100 : vector<1x256xf32> to vector<16x256xf32>
      %103 = arith.mulf %101, %102 : vector<16x256xf32>
      %104 = arith.truncf %103 : vector<16x256xf32> to vector<16x256xbf16>
      %c160 = arith.constant 160 : index
      %c0_57 = arith.constant 0 : index
      %105 = vector.load %arg12[%c160, %c0_57] : memref<288x256xbf16, #tpu.memory_space<vmem>>, vector<16x256xbf16>
      tpu.vector_store %arg12[%c160, %c0_57], %104 {strides = array<i32>} : memref<288x256xbf16, #tpu.memory_space<vmem>>, vector<16x256xbf16>,
      %c255_i32_58 = arith.constant 255 : i32
      %106 = tpu.dynamic_rotate %51 by %c255_i32_58 dim 1 : vector<16x256xf32>, i32 -> vector<16x256xf32>
      %107 = vector.broadcast %100 : vector<1x256xf32> to vector<16x256xf32>
      %108 = arith.mulf %106, %107 : vector<16x256xf32>
      %109 = arith.truncf %108 : vector<16x256xf32> to vector<16x256xbf16>
      %c176 = arith.constant 176 : index
      %c0_59 = arith.constant 0 : index
      %110 = vector.load %arg12[%c176, %c0_59] : memref<288x256xbf16, #tpu.memory_space<vmem>>, vector<16x256xbf16>
      tpu.vector_store %arg12[%c176, %c0_59], %109 {strides = array<i32>} : memref<288x256xbf16, #tpu.memory_space<vmem>>, vector<16x256xbf16>,
      %c6 = arith.constant 6 : index
      %c0_60 = arith.constant 0 : index
      %111 = vector.load %arg8[%c6, %c0_60] : memref<9x256xf32, #tpu.memory_space<vmem>>, vector<1x256xf32>
      %c241_i32 = arith.constant 241 : i32
      %112 = tpu.dynamic_rotate %36 by %c241_i32 dim 1 : vector<16x256xf32>, i32 -> vector<16x256xf32>
      %113 = vector.broadcast %111 : vector<1x256xf32> to vector<16x256xf32>
      %114 = arith.mulf %112, %113 : vector<16x256xf32>
      %115 = arith.truncf %114 : vector<16x256xf32> to vector<16x256xbf16>
      %c192 = arith.constant 192 : index
      %c0_61 = arith.constant 0 : index
      %116 = vector.load %arg12[%c192, %c0_61] : memref<288x256xbf16, #tpu.memory_space<vmem>>, vector<16x256xbf16>
      tpu.vector_store %arg12[%c192, %c0_61], %115 {strides = array<i32>} : memref<288x256xbf16, #tpu.memory_space<vmem>>, vector<16x256xbf16>,
      %c241_i32_62 = arith.constant 241 : i32
      %117 = tpu.dynamic_rotate %51 by %c241_i32_62 dim 1 : vector<16x256xf32>, i32 -> vector<16x256xf32>
      %118 = vector.broadcast %111 : vector<1x256xf32> to vector<16x256xf32>
      %119 = arith.mulf %117, %118 : vector<16x256xf32>
      %120 = arith.truncf %119 : vector<16x256xf32> to vector<16x256xbf16>
      %c208 = arith.constant 208 : index
      %c0_63 = arith.constant 0 : index
      %121 = vector.load %arg12[%c208, %c0_63] : memref<288x256xbf16, #tpu.memory_space<vmem>>, vector<16x256xbf16>
      tpu.vector_store %arg12[%c208, %c0_63], %120 {strides = array<i32>} : memref<288x256xbf16, #tpu.memory_space<vmem>>, vector<16x256xbf16>,
      %c7 = arith.constant 7 : index
      %c0_64 = arith.constant 0 : index
      %122 = vector.load %arg8[%c7, %c0_64] : memref<9x256xf32, #tpu.memory_space<vmem>>, vector<1x256xf32>
      %c240_i32 = arith.constant 240 : i32
      %123 = tpu.dynamic_rotate %36 by %c240_i32 dim 1 : vector<16x256xf32>, i32 -> vector<16x256xf32>
      %124 = vector.broadcast %122 : vector<1x256xf32> to vector<16x256xf32>
      %125 = arith.mulf %123, %124 : vector<16x256xf32>
      %126 = arith.truncf %125 : vector<16x256xf32> to vector<16x256xbf16>
      %c224 = arith.constant 224 : index
      %c0_65 = arith.constant 0 : index
      %127 = vector.load %arg12[%c224, %c0_65] : memref<288x256xbf16, #tpu.memory_space<vmem>>, vector<16x256xbf16>
      tpu.vector_store %arg12[%c224, %c0_65], %126 {strides = array<i32>} : memref<288x256xbf16, #tpu.memory_space<vmem>>, vector<16x256xbf16>,
      %c240_i32_66 = arith.constant 240 : i32
      %128 = tpu.dynamic_rotate %51 by %c240_i32_66 dim 1 : vector<16x256xf32>, i32 -> vector<16x256xf32>
      %129 = vector.broadcast %122 : vector<1x256xf32> to vector<16x256xf32>
      %130 = arith.mulf %128, %129 : vector<16x256xf32>
      %131 = arith.truncf %130 : vector<16x256xf32> to vector<16x256xbf16>
      %c240 = arith.constant 240 : index
      %c0_67 = arith.constant 0 : index
      %132 = vector.load %arg12[%c240, %c0_67] : memref<288x256xbf16, #tpu.memory_space<vmem>>, vector<16x256xbf16>
      tpu.vector_store %arg12[%c240, %c0_67], %131 {strides = array<i32>} : memref<288x256xbf16, #tpu.memory_space<vmem>>, vector<16x256xbf16>,
      %c8 = arith.constant 8 : index
      %c0_68 = arith.constant 0 : index
      %133 = vector.load %arg8[%c8, %c0_68] : memref<9x256xf32, #tpu.memory_space<vmem>>, vector<1x256xf32>
      %c239_i32 = arith.constant 239 : i32
      %134 = tpu.dynamic_rotate %36 by %c239_i32 dim 1 : vector<16x256xf32>, i32 -> vector<16x256xf32>
      %135 = vector.broadcast %133 : vector<1x256xf32> to vector<16x256xf32>
      %136 = arith.mulf %134, %135 : vector<16x256xf32>
      %137 = arith.truncf %136 : vector<16x256xf32> to vector<16x256xbf16>
      %c256 = arith.constant 256 : index
      %c0_69 = arith.constant 0 : index
      %138 = vector.load %arg12[%c256, %c0_69] : memref<288x256xbf16, #tpu.memory_space<vmem>>, vector<16x256xbf16>
      tpu.vector_store %arg12[%c256, %c0_69], %137 {strides = array<i32>} : memref<288x256xbf16, #tpu.memory_space<vmem>>, vector<16x256xbf16>,
      %c239_i32_70 = arith.constant 239 : i32
      %139 = tpu.dynamic_rotate %51 by %c239_i32_70 dim 1 : vector<16x256xf32>, i32 -> vector<16x256xf32>
      %140 = vector.broadcast %133 : vector<1x256xf32> to vector<16x256xf32>
      %141 = arith.mulf %139, %140 : vector<16x256xf32>
      %142 = arith.truncf %141 : vector<16x256xf32> to vector<16x256xbf16>
      %c272 = arith.constant 272 : index
      %c0_71 = arith.constant 0 : index
      %143 = vector.load %arg12[%c272, %c0_71] : memref<288x256xbf16, #tpu.memory_space<vmem>>, vector<16x256xbf16>
      tpu.vector_store %arg12[%c272, %c0_71], %142 {strides = array<i32>} : memref<288x256xbf16, #tpu.memory_space<vmem>>, vector<16x256xbf16>,
    } else {
    }
    %c256_i32 = arith.constant 256 : i32
    %3 = arith.muli %arg1, %c256_i32 : i32
    %c0_i32_1 = arith.constant 0 : i32
    %4 = arith.addi %3, %c0_i32_1 : i32
    %5 = tpu.assume_multiple %4, 128 : i32
    %6 = arith.index_cast %5 : i32 to index
    %c0 = arith.constant 0 : index
    %7 = vector.load %arg9[%6, %c0] : memref<512x288xbf16, #tpu.memory_space<vmem>>, vector<128x288xbf16>
    %8 = arith.index_cast %5 : i32 to index
    %c0_2 = arith.constant 0 : index
    %9 = vector.load %arg10[%8, %c0_2] : memref<512x1xf32, #tpu.memory_space<vmem>>, vector<128x1xf32>
    %c0_3 = arith.constant 0 : index
    %c0_4 = arith.constant 0 : index
    %10 = vector.load %arg12[%c0_3, %c0_4] : memref<288x256xbf16, #tpu.memory_space<vmem>>, vector<288x256xbf16>
    %cst = arith.constant dense<0.000000e+00> : vector<128x256xf32>
    %11 = tpu.matmul %7, %10, %cst {dimension_numbers = #tpu.dot_dimension_numbers<[1], [0], [0], [1], [0, 0, 1, 1], [], []>} : vector<128x288xbf16>, vector<288x256xbf16>, vector<128x256xf32> -> vector<128x256xf32>
    %12 = vector.broadcast %9 : vector<128x1xf32> to vector<128x256xf32>
    %13 = arith.addf %11, %12 : vector<128x256xf32>
    %cst_5 = arith.constant 0.000000e+00 : f32
    %14 = vector.broadcast %cst_5 : f32 to vector<128x256xf32>
    %15 = arith.maximumf %13, %14 : vector<128x256xf32>
    %c0_6 = arith.constant 0 : index
    %c0_7 = arith.constant 0 : index
    %c0_8 = arith.constant 0 : index
    %16 = vector.load %arg11[%c0_6, %c0_7, %c0_8] : memref<1x256x256xf32, #tpu.memory_space<vmem>>, vector<1x128x256xf32>
    %17 = vector.shape_cast %16 : vector<1x128x256xf32> to vector<128x256xf32>
    %18 = vector.shape_cast %15 : vector<128x256xf32> to vector<1x128x256xf32>
    tpu.vector_store %arg11[%c0_6, %c0_7, %c0_8], %18 {strides = array<i32>} : memref<1x256x256xf32, #tpu.memory_space<vmem>>, vector<1x128x256xf32>,
    %c256_i32_9 = arith.constant 256 : i32
    %19 = arith.muli %arg1, %c256_i32_9 : i32
    %c128_i32 = arith.constant 128 : i32
    %20 = arith.addi %19, %c128_i32 : i32
    %21 = tpu.assume_multiple %20, 128 : i32
    %22 = arith.index_cast %21 : i32 to index
    %c0_10 = arith.constant 0 : index
    %23 = vector.load %arg9[%22, %c0_10] : memref<512x288xbf16, #tpu.memory_space<vmem>>, vector<128x288xbf16>
    %24 = arith.index_cast %21 : i32 to index
    %c0_11 = arith.constant 0 : index
    %25 = vector.load %arg10[%24, %c0_11] : memref<512x1xf32, #tpu.memory_space<vmem>>, vector<128x1xf32>
    %c0_12 = arith.constant 0 : index
    %c0_13 = arith.constant 0 : index
    %26 = vector.load %arg12[%c0_12, %c0_13] : memref<288x256xbf16, #tpu.memory_space<vmem>>, vector<288x256xbf16>
    %cst_14 = arith.constant dense<0.000000e+00> : vector<128x256xf32>
    %27 = tpu.matmul %23, %26, %cst_14 {dimension_numbers = #tpu.dot_dimension_numbers<[1], [0], [0], [1], [0, 0, 1, 1], [], []>} : vector<128x288xbf16>, vector<288x256xbf16>, vector<128x256xf32> -> vector<128x256xf32>
    %28 = vector.broadcast %25 : vector<128x1xf32> to vector<128x256xf32>
    %29 = arith.addf %27, %28 : vector<128x256xf32>
    %cst_15 = arith.constant 0.000000e+00 : f32
    %30 = vector.broadcast %cst_15 : f32 to vector<128x256xf32>
    %31 = arith.maximumf %29, %30 : vector<128x256xf32>
    %c0_16 = arith.constant 0 : index
    %c128 = arith.constant 128 : index
    %c0_17 = arith.constant 0 : index
    %32 = vector.load %arg11[%c0_16, %c128, %c0_17] : memref<1x256x256xf32, #tpu.memory_space<vmem>>, vector<1x128x256xf32>
    %33 = vector.shape_cast %32 : vector<1x128x256xf32> to vector<128x256xf32>
    %34 = vector.shape_cast %31 : vector<128x256xf32> to vector<1x128x256xf32>
    tpu.vector_store %arg11[%c0_16, %c128, %c0_17], %34 {strides = array<i32>} : memref<1x256x256xf32, #tpu.memory_space<vmem>>, vector<1x128x256xf32>,
    return
  }
  func.func @transform_0(%arg0: i32, %arg1: i32) -> (i32, i32, i32) {
    %c0_i32 = arith.constant 0 : i32
    %c0_i32_0 = arith.constant 0 : i32
    %c0_i32_1 = arith.constant 0 : i32
    return %arg0, %c0_i32, %c0_i32_0 : i32, i32, i32
  }
  func.func @transform_1(%arg0: i32, %arg1: i32) -> (i32, i32) {
    %c0_i32 = arith.constant 0 : i32
    %c0_i32_0 = arith.constant 0 : i32
    %c0_i32_1 = arith.constant 0 : i32
    return %c0_i32, %c0_i32_0 : i32, i32
  }
  func.func @transform_2(%arg0: i32, %arg1: i32) -> (i32, i32) {
    %c0_i32 = arith.constant 0 : i32
    %c0_i32_0 = arith.constant 0 : i32
    %c0_i32_1 = arith.constant 0 : i32
    return %c0_i32, %c0_i32_0 : i32, i32
  }
  func.func @transform_3(%arg0: i32, %arg1: i32) -> (i32, i32) {
    %c0_i32 = arith.constant 0 : i32
    %c0_i32_0 = arith.constant 0 : i32
    %c0_i32_1 = arith.constant 0 : i32
    return %c0_i32, %c0_i32_0 : i32, i32
  }
  func.func @transform_4(%arg0: i32, %arg1: i32) -> (i32, i32) {
    %c0_i32 = arith.constant 0 : i32
    %c0_i32_0 = arith.constant 0 : i32
    %c0_i32_1 = arith.constant 0 : i32
    return %c0_i32, %c0_i32_0 : i32, i32
  }
  func.func @transform_5(%arg0: i32, %arg1: i32) -> (i32, i32) {
    %c0_i32 = arith.constant 0 : i32
    %c0_i32_0 = arith.constant 0 : i32
    %c0_i32_1 = arith.constant 0 : i32
    return %c0_i32, %c0_i32_0 : i32, i32
  }
  func.func @transform_6(%arg0: i32, %arg1: i32) -> (i32, i32) {
    %c0_i32 = arith.constant 0 : i32
    %c0_i32_0 = arith.constant 0 : i32
    %c0_i32_1 = arith.constant 0 : i32
    return %c0_i32, %c0_i32_0 : i32, i32
  }
  func.func @transform_7(%arg0: i32, %arg1: i32) -> (i32, i32) {
    %c0_i32 = arith.constant 0 : i32
    %c0_i32_0 = arith.constant 0 : i32
    %c0_i32_1 = arith.constant 0 : i32
    return %c0_i32, %c0_i32_0 : i32, i32
  }
  func.func @transform_8(%arg0: i32, %arg1: i32) -> (i32, i32) {
    %c0_i32 = arith.constant 0 : i32
    %c0_i32_0 = arith.constant 0 : i32
    %c0_i32_1 = arith.constant 0 : i32
    return %c0_i32, %c0_i32_0 : i32, i32
  }
  func.func @transform_9(%arg0: i32, %arg1: i32) -> (i32, i32, i32) {
    %c0_i32 = arith.constant 0 : i32
    %c0_i32_0 = arith.constant 0 : i32
    return %arg0, %arg1, %c0_i32 : i32, i32, i32
  }
}

</mosaic_0001>

<llo_original>
// kernel: tpu_custom_call.1
$region0: #{tpu_custom_call.1}
  #allocation0 [shape = 'u32[]', space=smem, size = 0x4, offset = 0x4, fixed_abs, tag = 'smem constant byte address 0x4 - core index']
  #allocation1 [shape = 'u32[72,128]{1,0:T(1,128)}', space=vmem, size = 0x9000, scoped, tag = 'internal scratch']
  #allocation2 [shape = 'bf16[288,256]{1,0:T(8,128)(2,1)}', space=vmem, size = 0x24000, scoped, tag = 'scratch operand']
  %s0 = inlined_call_operand.vmem [shape: f32[2,16,256], index: 0, kind: input, shape index: {}]
  %s1 = inlined_call_operand.vmem [shape: bf16[16,16], index: 1, kind: input, shape index: {}]
  %s2 = inlined_call_operand.vmem [shape: bf16[256,128], index: 2, kind: input, shape index: {}]
  %s3 = inlined_call_operand.vmem [shape: f32[16,128], index: 3, kind: input, shape index: {}]
  %s4 = inlined_call_operand.vmem [shape: f32[16,128], index: 4, kind: input, shape index: {}]
  %s5 = inlined_call_operand.vmem [shape: bf16[128,256], index: 5, kind: input, shape index: {}]
  %s6 = inlined_call_operand.vmem [shape: f32[9,256], index: 6, kind: input, shape index: {}]
  %s7 = inlined_call_operand.vmem [shape: bf16[512,288], index: 7, kind: input, shape index: {}]
  %s8 = inlined_call_operand.vmem [shape: f32[512,1], index: 8, kind: input, shape index: {}]
  %s9 = inlined_call_operand.hbm [shape: f32[2,512,256], index: 9, kind: output, shape index: {}]
  %s10 = sld [smem:[#allocation0]]
  $region73: #{tpu_custom_call.1} parent=0
    _
  %s12 = ssub.s32 1, %s10
  %s13 = scalar_select 0, %s12, %s10
  $region1: #{tpu_custom_call.1} parent=0
    #allocation3 [shape = 'u8[524288]{0}', space=vmem, size = 0x80000, scoped, tag = 'output window, operand 0']
    #allocation4 [shape = 's32[2]{0}', space=sflag, size = 0x8, scoped, tag = 'scoped memory for tpu_custom_call.1']
    %14 = vsyncpa [#allocation4], 0
    %s15 = scalar_lea.sflag [#allocation4], 1
    %16 = vsyncpa %s15, 0
    loop: start=0, step=1, limit=6
    $region2: #{tpu_custom_call.1} parent=1 // loop_pre_header
      _
    $region3: #{tpu_custom_call.1} parent=1 // loop_header
      %s18 = sphi 0, %s22
      %p19 = scmp.ge.s32.totalorder %s18, 6
      %s25 = sphi 0, %s37
      %s26 = sphi 0, %s33
      %s27 = sphi 0, %s25
      %s28 = sphi 0, %s26
      %s29 = sphi 0, %s27
      %s30 = sphi 0, %s28
      %s40 = sphi 0, %s42
      %s43 = sphi 0, %s40
      %s44 = sphi 0, %s43
      %s60 = sphi 0, %s44
      %s64 = sphi 0, %s64
      %s66 = sphi 0, %s64
      %s67 = sphi 0, %s66
      %s81 = sphi 0, %s67
      %s85 = sphi 0, %s85
      %s87 = sphi 0, %s85
      %s88 = sphi 0, %s87
      %s102 = sphi 0, %s88
      %s106 = sphi 0, %s106
      %s108 = sphi 0, %s106
      %s109 = sphi 0, %s108
      %s123 = sphi 0, %s109
      %s127 = sphi 0, %s127
      %s129 = sphi 0, %s127
      %s130 = sphi 0, %s129
      %s144 = sphi 0, %s130
      %s148 = sphi 0, %s148
      %s150 = sphi 0, %s148
      %s151 = sphi 0, %s150
      %s165 = sphi 0, %s151
      %s169 = sphi 0, %s169
      %s171 = sphi 0, %s169
      %s172 = sphi 0, %s171
      %s186 = sphi 0, %s172
      %s190 = sphi 0, %s190
      %s192 = sphi 0, %s190
      %s193 = sphi 0, %s192
      %s207 = sphi 0, %s193
      %s211 = sphi 0, %s211
      %s213 = sphi 0, %s211
      %s214 = sphi 0, %s213
      %s228 = sphi 0, %s214
      %s236 = sphi 0, %s238
      %s239 = sphi 0, %s236
      %s240 = sphi 0, %s239
      %s256 = sphi 0, %s240
    $region4: #{tpu_custom_call.1} parent=1 // loop_header_branch
      %21 = sbr.rel (%p19) target = $region8
    $region5: #{tpu_custom_call.1} parent=1 // loop_body
      %s23 = ssub.s32 %s18, 1
      %s24 = ssub.s32 %s18, 2
      %s31 = sadd.s32 1, %s26
      %p32 = scmp.ge.s32.totalorder %s31, 2
      %s33 = scalar_select %p32, 0, %s31
      %s34 = sadd.s32 1, %s25
      %s35 = scalar_select %p32, %s34, %s25
      %p36 = scmp.ge.s32.totalorder %s35, 2
      %s37 = scalar_select %p36, 0, %s35
      %s38 = ssub.s32 %s25, %s37
      %p39 = scmp.eq.s32.totalorder %s38, 0
      %s41 = sadd.s32 %s40, 1
      %s42 = scalar_select %p39, %s40, %s41
      %p45 = pneg %p39
      %p46 = scmp.eq.s32.totalorder %s18, 3
      %p47 = por %p45, %p46
      %p48 = scmp.ne.s32.totalorder %s40, %s43
      %p49 = scmp.eq.s32.totalorder %s18, 0
      %p50 = por %p48, %p49
      %p51 = scmp.ne.s32.totalorder %s40, %s43
      %p52 = scmp.eq.s32.totalorder %s23, 3
      %p53 = por %p51, %p52
      %p54 = scmp.ne.s32.totalorder %s43, %s44
      %p55 = scmp.eq.s32.totalorder %s23, 0
      %p56 = por %p54, %p55
      %p57 = scmp.ne.s32.totalorder %s43, %s44
      %p58 = scmp.eq.s32.totalorder %s24, 3
      %p59 = por %p57, %p58
      %p61 = scmp.ne.s32.totalorder %s44, %s60
      %p62 = scmp.eq.s32.totalorder %s24, 0
      %p63 = por %p61, %p62
      %s65 = sadd.s32 %s64, 1
      %p68 = scmp.eq.s32.totalorder %s18, 3
      %p69 = scmp.ne.s32.totalorder %s64, %s66
      %p70 = scmp.eq.s32.totalorder %s18, 0
      %p71 = por %p69, %p70
      %p72 = scmp.ne.s32.totalorder %s64, %s66
      %p73 = scmp.eq.s32.totalorder %s23, 3
      %p74 = por %p72, %p73
      %p75 = scmp.ne.s32.totalorder %s66, %s67
      %p76 = scmp.eq.s32.totalorder %s23, 0
      %p77 = por %p75, %p76
      %p78 = scmp.ne.s32.totalorder %s66, %s67
      %p79 = scmp.eq.s32.totalorder %s24, 3
      %p80 = por %p78, %p79
      %p82 = scmp.ne.s32.totalorder %s67, %s81
      %p83 = scmp.eq.s32.totalorder %s24, 0
      %p84 = por %p82, %p83
      %s86 = sadd.s32 %s85, 1
      %p89 = scmp.eq.s32.totalorder %s18, 3
      %p90 = scmp.ne.s32.totalorder %s85, %s87
      %p91 = scmp.eq.s32.totalorder %s18, 0
      %p92 = por %p90, %p91
      %p93 = scmp.ne.s32.totalorder %s85, %s87
      %p94 = scmp.eq.s32.totalorder %s23, 3
      %p95 = por %p93, %p94
      %p96 = scmp.ne.s32.totalorder %s87, %s88
      %p97 = scmp.eq.s32.totalorder %s23, 0
      %p98 = por %p96, %p97
      %p99 = scmp.ne.s32.totalorder %s87, %s88
      %p100 = scmp.eq.s32.totalorder %s24, 3
      %p101 = por %p99, %p100
      %p103 = scmp.ne.s32.totalorder %s88, %s102
      %p104 = scmp.eq.s32.totalorder %s24, 0
      %p105 = por %p103, %p104
      %s107 = sadd.s32 %s106, 1
      %p110 = scmp.eq.s32.totalorder %s18, 3
      %p111 = scmp.ne.s32.totalorder %s106, %s108
      %p112 = scmp.eq.s32.totalorder %s18, 0
      %p113 = por %p111, %p112
      %p114 = scmp.ne.s32.totalorder %s106, %s108
      %p115 = scmp.eq.s32.totalorder %s23, 3
      %p116 = por %p114, %p115
      %p117 = scmp.ne.s32.totalorder %s108, %s109
      %p118 = scmp.eq.s32.totalorder %s23, 0
      %p119 = por %p117, %p118
      %p120 = scmp.ne.s32.totalorder %s108, %s109
      %p121 = scmp.eq.s32.totalorder %s24, 3
      %p122 = por %p120, %p121
      %p124 = scmp.ne.s32.totalorder %s109, %s123
      %p125 = scmp.eq.s32.totalorder %s24, 0
      %p126 = por %p124, %p125
      %s128 = sadd.s32 %s127, 1
      %p131 = scmp.eq.s32.totalorder %s18, 3
      %p132 = scmp.ne.s32.totalorder %s127, %s129
      %p133 = scmp.eq.s32.totalorder %s18, 0
      %p134 = por %p132, %p133
      %p135 = scmp.ne.s32.totalorder %s127, %s129
      %p136 = scmp.eq.s32.totalorder %s23, 3
      %p137 = por %p135, %p136
      %p138 = scmp.ne.s32.totalorder %s129, %s130
      %p139 = scmp.eq.s32.totalorder %s23, 0
      %p140 = por %p138, %p139
      %p141 = scmp.ne.s32.totalorder %s129, %s130
      %p142 = scmp.eq.s32.totalorder %s24, 3
      %p143 = por %p141, %p142
      %p145 = scmp.ne.s32.totalorder %s130, %s144
      %p146 = scmp.eq.s32.totalorder %s24, 0
      %p147 = por %p145, %p146
      %s149 = sadd.s32 %s148, 1
      %p152 = scmp.eq.s32.totalorder %s18, 3
      %p153 = scmp.ne.s32.totalorder %s148, %s150
      %p154 = scmp.eq.s32.totalorder %s18, 0
      %p155 = por %p153, %p154
      %p156 = scmp.ne.s32.totalorder %s148, %s150
      %p157 = scmp.eq.s32.totalorder %s23, 3
      %p158 = por %p156, %p157
      %p159 = scmp.ne.s32.totalorder %s150, %s151
      %p160 = scmp.eq.s32.totalorder %s23, 0
      %p161 = por %p159, %p160
      %p162 = scmp.ne.s32.totalorder %s150, %s151
      %p163 = scmp.eq.s32.totalorder %s24, 3
      %p164 = por %p162, %p163
      %p166 = scmp.ne.s32.totalorder %s151, %s165
      %p167 = scmp.eq.s32.totalorder %s24, 0
      %p168 = por %p166, %p167
      %s170 = sadd.s32 %s169, 1
      %p173 = scmp.eq.s32.totalorder %s18, 3
      %p174 = scmp.ne.s32.totalorder %s169, %s171
      %p175 = scmp.eq.s32.totalorder %s18, 0
      %p176 = por %p174, %p175
      %p177 = scmp.ne.s32.totalorder %s169, %s171
      %p178 = scmp.eq.s32.totalorder %s23, 3
      %p179 = por %p177, %p178
      %p180 = scmp.ne.s32.totalorder %s171, %s172
      %p181 = scmp.eq.s32.totalorder %s23, 0
      %p182 = por %p180, %p181
      %p183 = scmp.ne.s32.totalorder %s171, %s172
      %p184 = scmp.eq.s32.totalorder %s24, 3
      %p185 = por %p183, %p184
      %p187 = scmp.ne.s32.totalorder %s172, %s186
      %p188 = scmp.eq.s32.totalorder %s24, 0
      %p189 = por %p187, %p188
      %s191 = sadd.s32 %s190, 1
      %p194 = scmp.eq.s32.totalorder %s18, 3
      %p195 = scmp.ne.s32.totalorder %s190, %s192
      %p196 = scmp.eq.s32.totalorder %s18, 0
      %p197 = por %p195, %p196
      %p198 = scmp.ne.s32.totalorder %s190, %s192
      %p199 = scmp.eq.s32.totalorder %s23, 3
      %p200 = por %p198, %p199
      %p201 = scmp.ne.s32.totalorder %s192, %s193
      %p202 = scmp.eq.s32.totalorder %s23, 0
      %p203 = por %p201, %p202
      %p204 = scmp.ne.s32.totalorder %s192, %s193
      %p205 = scmp.eq.s32.totalorder %s24, 3
      %p206 = por %p204, %p205
      %p208 = scmp.ne.s32.totalorder %s193, %s207
      %p209 = scmp.eq.s32.totalorder %s24, 0
      %p210 = por %p208, %p209
      %s212 = sadd.s32 %s211, 1
      %p215 = scmp.eq.s32.totalorder %s18, 3
      %p216 = scmp.ne.s32.totalorder %s211, %s213
      %p217 = scmp.eq.s32.totalorder %s18, 0
      %p218 = por %p216, %p217
      %p219 = scmp.ne.s32.totalorder %s211, %s213
      %p220 = scmp.eq.s32.totalorder %s23, 3
      %p221 = por %p219, %p220
      %p222 = scmp.ne.s32.totalorder %s213, %s214
      %p223 = scmp.eq.s32.totalorder %s23, 0
      %p224 = por %p222, %p223
      %p225 = scmp.ne.s32.totalorder %s213, %s214
      %p226 = scmp.eq.s32.totalorder %s24, 3
      %p227 = por %p225, %p226
      %p229 = scmp.ne.s32.totalorder %s214, %s228
      %p230 = scmp.eq.s32.totalorder %s24, 0
      %p231 = por %p229, %p230
      %s232 = ssub.s32 %s25, %s37
      %s233 = ssub.s32 %s26, %s33
      %s234 = sor.u32 %s232, %s233
      %p235 = scmp.eq.s32.totalorder %s234, 0
      %s237 = sadd.s32 %s236, 1
      %s238 = scalar_select %p235, %s236, %s237
      %p241 = pneg %p235
      %p242 = scmp.eq.s32.totalorder %s18, 3
      %p243 = por %p241, %p242
      %p244 = scmp.ne.s32.totalorder %s236, %s239
      %p245 = scmp.eq.s32.totalorder %s18, 0
      %p246 = por %p244, %p245
      %p247 = scmp.ne.s32.totalorder %s236, %s239
      %p248 = scmp.eq.s32.totalorder %s23, 3
      %p249 = por %p247, %p248
      %p250 = scmp.ne.s32.totalorder %s239, %s240
      %p251 = scmp.eq.s32.totalorder %s23, 0
      %p252 = por %p250, %p251
      %p253 = scmp.ne.s32.totalorder %s239, %s240
      %p254 = scmp.eq.s32.totalorder %s24, 3
      %p255 = por %p253, %p254
      %p257 = scmp.ne.s32.totalorder %s240, %s256
      %p258 = scmp.eq.s32.totalorder %s24, 0
      %p259 = por %p257, %p258
      %p260 = scmp.le.s32.totalorder 1, %s18
      %p261 = scmp.lt.s32.totalorder %s18, 5
      %p262 = pnand %p260, %p261
      %p263 = pneg %p262
      // Predicated region
      $region9: #{tpu_custom_call.1} parent=5 // pred_check
        _
      $region10: #{tpu_custom_call.1} parent=5 // pred_check_branch
        %265 = sbr.rel (%p262) target = $region12
      $region11: #{tpu_custom_call.1} parent=5 // pred_region
        %s266 = ssub.s32 %s18, 1
        // Predicated region
        $region13: #{tpu_custom_call.1} parent=11 // pred_check
          %p267 = pneg %p77
        $region14: #{tpu_custom_call.1} parent=11 // pred_check_branch
          %269 = sbr.rel (%p267) target = $region16
        $region15: #{tpu_custom_call.1} parent=11 // pred_region
          _
        $region16: #{tpu_custom_call.1} parent=11 // pred_fallthru
          _
        // Predicated region
        $region17: #{tpu_custom_call.1} parent=11 // pred_check
          %p270 = pneg %p98
        $region18: #{tpu_custom_call.1} parent=11 // pred_check_branch
          %272 = sbr.rel (%p270) target = $region20
        $region19: #{tpu_custom_call.1} parent=11 // pred_region
          _
        $region20: #{tpu_custom_call.1} parent=11 // pred_fallthru
          _
        // Predicated region
        $region21: #{tpu_custom_call.1} parent=11 // pred_check
          %p273 = pneg %p119
        $region22: #{tpu_custom_call.1} parent=11 // pred_check_branch
          %275 = sbr.rel (%p273) target = $region24
        $region23: #{tpu_custom_call.1} parent=11 // pred_region
          _
        $region24: #{tpu_custom_call.1} parent=11 // pred_fallthru
          _
        // Predicated region
        $region25: #{tpu_custom_call.1} parent=11 // pred_check
          %p276 = pneg %p140
        $region26: #{tpu_custom_call.1} parent=11 // pred_check_branch
          %278 = sbr.rel (%p276) target = $region28
        $region27: #{tpu_custom_call.1} parent=11 // pred_region
          _
        $region28: #{tpu_custom_call.1} parent=11 // pred_fallthru
          _
        // Predicated region
        $region29: #{tpu_custom_call.1} parent=11 // pred_check
          %p279 = pneg %p161
        $region30: #{tpu_custom_call.1} parent=11 // pred_check_branch
          %281 = sbr.rel (%p279) target = $region32
        $region31: #{tpu_custom_call.1} parent=11 // pred_region
          _
        $region32: #{tpu_custom_call.1} parent=11 // pred_fallthru
          _
        // Predicated region
        $region33: #{tpu_custom_call.1} parent=11 // pred_check
          %p282 = pneg %p182
        $region34: #{tpu_custom_call.1} parent=11 // pred_check_branch
          %284 = sbr.rel (%p282) target = $region36
        $region35: #{tpu_custom_call.1} parent=11 // pred_region
          _
        $region36: #{tpu_custom_call.1} parent=11 // pred_fallthru
          _
        // Predicated region
        $region37: #{tpu_custom_call.1} parent=11 // pred_check
          %p285 = pneg %p203
        $region38: #{tpu_custom_call.1} parent=11 // pred_check_branch
          %287 = sbr.rel (%p285) target = $region40
        $region39: #{tpu_custom_call.1} parent=11 // pred_region
          _
        $region40: #{tpu_custom_call.1} parent=11 // pred_fallthru
          _
        // Predicated region
        $region41: #{tpu_custom_call.1} parent=11 // pred_check
          %p288 = pneg %p224
        $region42: #{tpu_custom_call.1} parent=11 // pred_check_branch
          %290 = sbr.rel (%p288) target = $region44
        $region43: #{tpu_custom_call.1} parent=11 // pred_region
          _
        $region44: #{tpu_custom_call.1} parent=11 // pred_fallthru
          _
      $region12: #{tpu_custom_call.1} parent=5 // pred_fallthru
        _
      %p291 = scmp.lt.s32.totalorder %s18, 4
      // Predicated region
      $region45: #{tpu_custom_call.1} parent=5 // pred_check
        %p292 = pneg %p291
      $region46: #{tpu_custom_call.1} parent=5 // pred_check_branch
        %294 = sbr.rel (%p292) target = $region48
      $region47: #{tpu_custom_call.1} parent=5 // pred_region
        // Predicated region
        $region49: #{tpu_custom_call.1} parent=47 // pred_check
          %p295 = pneg %p50
        $region50: #{tpu_custom_call.1} parent=47 // pred_check_branch
          %297 = sbr.rel (%p295) target = $region52
        $region51: #{tpu_custom_call.1} parent=47 // pred_region
          %p298 = scmp.lt.s32.totalorder %s25, 1
          %s299 = scalar_select %p298, %s25, 1
          %s300 = smul.addr %s299, 4
          %s301 = smul.addr %s300, 8
          %s302 = scalar_lea.vmem %s0, %s301
        $region52: #{tpu_custom_call.1} parent=47 // pred_fallthru
          _
      $region48: #{tpu_custom_call.1} parent=5 // pred_fallthru
        _
      %p303 = scmp.le.s32.totalorder 1, %s18
      %p304 = scmp.lt.s32.totalorder %s18, 5
      %p305 = pnand %p303, %p304
      %p306 = pneg %p305
      // Predicated region
      $region53: #{tpu_custom_call.1} parent=5 // pred_check
        _
      $region54: #{tpu_custom_call.1} parent=5 // pred_check_branch
        %308 = sbr.rel (%p305) target = $region56
      $region55: #{tpu_custom_call.1} parent=5 // pred_region
        %s309 = ssub.s32 %s18, 1
        %p310 = scmp.lt.s32.totalorder %s27, 1
        %s311 = scalar_select %p310, %s27, 1
        %s312 = smul.addr %s311, 4
        %s313 = smul.addr %s312, 8
        %s314 = scalar_lea.vmem %s0, %s313
        %p315 = pneg %p56
        %p316 = pneg %p53
        %p317 = pneg %p77
        %p318 = pneg %p74
        %p319 = pneg %p98
        %p320 = pneg %p95
        %p321 = pneg %p119
        %p322 = pneg %p116
        %p323 = pneg %p140
        %p324 = pneg %p137
        %p325 = pneg %p161
        %p326 = pneg %p158
        %p327 = pneg %p182
        %p328 = pneg %p179
        %p329 = pneg %p203
        %p330 = pneg %p200
        %p331 = pneg %p224
        %p332 = pneg %p221
        %p333 = pneg %p252
        %p334 = pneg %p249
        %s335 = sand.u32 %s239, 1
        %s336 = scalar_lea.sflag [#allocation4], %s335
        %s337 = sand.u32 %s239, 1
        %s338 = smul.addr %s337, 512
        %s339 = scalar_lea.vmem [#allocation3], %s338
        %p340 = scmp.lt.s32.totalorder %s27, 1
        %s341 = scalar_select %p340, %s27, 1
        %s342 = smul.addr %s341, 4
        %s343 = smul.addr %s342, 8
        %s344 = scalar_lea.vmem %s0, %s343
        %s345 = smul.u32 32, %s28
        %p347 = scmp.eq.s32.totalorder %s28, 0
        // Predicated region
        $region57: #{tpu_custom_call.1} parent=55 // pred_check
          %p348 = pneg %p347
        $region58: #{tpu_custom_call.1} parent=55 // pred_check_branch
          %350 = sbr.rel (%p348) target = $region60
        $region59: #{tpu_custom_call.1} parent=55 // pred_region
          %v351 = vld [vmem:[%s344] sm:$0xff]
          %v352 = vld [vmem:[%s344 + $0x8] sm:$0xff]
          %v353 = vld [vmem:[%s344 + $0x10] sm:$0xff]
          %v354 = vld [vmem:[%s344 + $0x18] sm:$0xff]
          %v355 = vld [vmem:[%s1] sm:$0xf]
          %v356 = vld [vmem:[%s1 + $0x4] sm:$0xf]
          %v357 = vpack.c.bf16 %v352, %v351
          %v358 = vpack.c.bf16 %v354, %v353
          %v361 = vunpack.c.l.b16 %v355
          %v362 = vunpack.c.l.b16 %v356
          %v363 = vpack.c.b16 %v362, %v361
          %v366 = vunpack.c.l.b16 %v357
          %v367 = vunpack.c.h.b16 %v357
          %v368 = vunpack.c.l.b16 %v358
          %v369 = vunpack.c.h.b16 %v358
          %v370 = vpack.c.b16 %v368, %v366
          %v371 = vpack.c.b16 %v369, %v367
          %vm374 = vcmask 130048
          %v376 = vsel %vm374, %v363, 0
          %378 = vmatpush.bf16.msra.mxu0 0
          %379 = vmatpush.bf16.msra.mxu0 0
          %380 = vmatpush.bf16.msra.mxu0 0
          %381 = vmatpush.bf16.msra.mxu0 0
          %382 = vmatpush.bf16.msra.mxu0 0
          %383 = vmatpush.bf16.msra.mxu0 0
          %384 = vmatpush.bf16.msra.mxu0 0
          %385 = vmatpush.bf16.msra.mxu0 %v370
          %386 = vmatmul.bf16.gmra.mxu0 %v376
          %v387 = vpop.f32.mrf.mxu0
          %v388 = vadd.f32 0.0, %v387
          %v389 = vpop.f32.mrf.mxu0
          %v390 = vadd.f32 0.0, %v389
          %391 = vdwg.mxu0
          %392 = vmatpush.bf16.msra.mxu0 0
          %393 = vmatpush.bf16.msra.mxu0 0
          %394 = vmatpush.bf16.msra.mxu0 0
          %395 = vmatpush.bf16.msra.mxu0 0
          %396 = vmatpush.bf16.msra.mxu0 0
          %397 = vmatpush.bf16.msra.mxu0 0
          %398 = vmatpush.bf16.msra.mxu0 0
          %399 = vmatpush.bf16.msra.mxu0 %v371
          %400 = vmatmul.bf16.gmra.mxu0 %v376
          %v401 = vpop.f32.mrf.mxu0
          %v402 = vadd.f32 0.0, %v401
          %v403 = vpop.f32.mrf.mxu0
          %v404 = vadd.f32 0.0, %v403
          %405 = vdwg.mxu0
          %v406 = vpack.c.bf16 %v390, %v388
          %v407 = vpack.c.bf16 %v404, %v402
          %v408 = vld [vmem:[%s2] sm:$0xf]
          %v409 = vld [vmem:[%s2 + $0x4] sm:$0xf]
          %v410 = vld [vmem:[%s2 + $0x8] sm:$0xf]
          %v411 = vld [vmem:[%s2 + $0xc] sm:$0xf]
          %v412 = vld [vmem:[%s2 + $0x10] sm:$0xf]
          %v413 = vld [vmem:[%s2 + $0x14] sm:$0xf]
          %v414 = vld [vmem:[%s2 + $0x18] sm:$0xf]
          %v415 = vld [vmem:[%s2 + $0x1c] sm:$0xf]
          %v416 = vld [vmem:[%s2 + $0x20] sm:$0xf]
          %v417 = vld [vmem:[%s2 + $0x24] sm:$0xf]
          %v418 = vld [vmem:[%s2 + $0x28] sm:$0xf]
          %v419 = vld [vmem:[%s2 + $0x2c] sm:$0xf]
          %v420 = vld [vmem:[%s2 + $0x30] sm:$0xf]
          %v421 = vld [vmem:[%s2 + $0x34] sm:$0xf]
          %v422 = vld [vmem:[%s2 + $0x38] sm:$0xf]
          %v423 = vld [vmem:[%s2 + $0x3c] sm:$0xf]
          %v424 = vld [vmem:[%s2 + $0x40] sm:$0xf]
          %v425 = vld [vmem:[%s2 + $0x44] sm:$0xf]
          %v426 = vld [vmem:[%s2 + $0x48] sm:$0xf]
          %v427 = vld [vmem:[%s2 + $0x4c] sm:$0xf]
          %v428 = vld [vmem:[%s2 + $0x50] sm:$0xf]
          %v429 = vld [vmem:[%s2 + $0x54] sm:$0xf]
          %v430 = vld [vmem:[%s2 + $0x58] sm:$0xf]
          %v431 = vld [vmem:[%s2 + $0x5c] sm:$0xf]
          %v432 = vld [vmem:[%s2 + $0x60] sm:$0xf]
          %v433 = vld [vmem:[%s2 + $0x64] sm:$0xf]
          %v434 = vld [vmem:[%s2 + $0x68] sm:$0xf]
          %v435 = vld [vmem:[%s2 + $0x6c] sm:$0xf]
          %v436 = vld [vmem:[%s2 + $0x70] sm:$0xf]
          %v437 = vld [vmem:[%s2 + $0x74] sm:$0xf]
          %v438 = vld [vmem:[%s2 + $0x78] sm:$0xf]
          %v439 = vld [vmem:[%s2 + $0x7c] sm:$0xf]
          %v472 = vunpack.c.l.b16 %v408
          %v473 = vunpack.c.l.b16 %v409
          %v474 = vunpack.c.l.b16 %v410
          %v475 = vunpack.c.l.b16 %v411
          %v476 = vunpack.c.l.b16 %v412
          %v477 = vunpack.c.l.b16 %v413
          %v478 = vunpack.c.l.b16 %v414
          %v479 = vunpack.c.l.b16 %v415
          %v480 = vunpack.c.l.b16 %v416
          %v481 = vunpack.c.l.b16 %v417
          %v482 = vunpack.c.l.b16 %v418
          %v483 = vunpack.c.l.b16 %v419
          %v484 = vunpack.c.l.b16 %v420
          %v485 = vunpack.c.l.b16 %v421
          %v486 = vunpack.c.l.b16 %v422
          %v487 = vunpack.c.l.b16 %v423
          %v488 = vunpack.c.l.b16 %v424
          %v489 = vunpack.c.l.b16 %v425
          %v490 = vunpack.c.l.b16 %v426
          %v491 = vunpack.c.l.b16 %v427
          %v492 = vunpack.c.l.b16 %v428
          %v493 = vunpack.c.l.b16 %v429
          %v494 = vunpack.c.l.b16 %v430
          %v495 = vunpack.c.l.b16 %v431
          %v496 = vunpack.c.l.b16 %v432
          %v497 = vunpack.c.l.b16 %v433
          %v498 = vunpack.c.l.b16 %v434
          %v499 = vunpack.c.l.b16 %v435
          %v500 = vunpack.c.l.b16 %v436
          %v501 = vunpack.c.l.b16 %v437
          %v502 = vunpack.c.l.b16 %v438
          %v503 = vunpack.c.l.b16 %v439
          %v504 = vpack.c.b16 %v473, %v472
          %v505 = vpack.c.b16 %v475, %v474
          %v506 = vpack.c.b16 %v477, %v476
          %v507 = vpack.c.b16 %v479, %v478
          %v508 = vpack.c.b16 %v481, %v480
          %v509 = vpack.c.b16 %v483, %v482
          %v510 = vpack.c.b16 %v485, %v484
          %v511 = vpack.c.b16 %v487, %v486
          %v512 = vpack.c.b16 %v489, %v488
          %v513 = vpack.c.b16 %v491, %v490
          %v514 = vpack.c.b16 %v493, %v492
          %v515 = vpack.c.b16 %v495, %v494
          %v516 = vpack.c.b16 %v497, %v496
          %v517 = vpack.c.b16 %v499, %v498
          %v518 = vpack.c.b16 %v501, %v500
          %v519 = vpack.c.b16 %v503, %v502
          %536 = vmatpush.bf16.msra.mxu0 %v511
          %537 = vmatpush.bf16.msra.mxu0 %v510
          %538 = vmatpush.bf16.msra.mxu0 %v509
          %539 = vmatpush.bf16.msra.mxu0 %v508
          %540 = vmatpush.bf16.msra.mxu0 %v507
          %541 = vmatpush.bf16.msra.mxu0 %v506
          %542 = vmatpush.bf16.msra.mxu0 %v505
          %543 = vmatpush.bf16.msra.mxu0 %v504
          %544 = vmatmul.bf16.gmra.mxu0 %v406
          %v545 = vpop.f32.mrf.mxu0
          %v546 = vadd.f32 0.0, %v545
          %v547 = vpop.f32.mrf.mxu0
          %v548 = vadd.f32 0.0, %v547
          %549 = vdwg.mxu0
          %550 = vmatpush.bf16.msra.mxu0 %v519
          %551 = vmatpush.bf16.msra.mxu0 %v518
          %552 = vmatpush.bf16.msra.mxu0 %v517
          %553 = vmatpush.bf16.msra.mxu0 %v516
          %554 = vmatpush.bf16.msra.mxu0 %v515
          %555 = vmatpush.bf16.msra.mxu0 %v514
          %556 = vmatpush.bf16.msra.mxu0 %v513
          %557 = vmatpush.bf16.msra.mxu0 %v512
          %558 = vmatmul.bf16.gmra.mxu0 %v407
          %v559 = vpop.f32.mrf.mxu0
          %v560 = vadd.f32 %v546, %v559
          %v561 = vpop.f32.mrf.mxu0
          %v562 = vadd.f32 %v548, %v561
          %563 = vdwg.mxu0
          %v564 = vld [vmem:[%s3] sm:$0xff]
          %v565 = vld [vmem:[%s3 + $0x8] sm:$0xff]
          %v566 = vmul.f32 %v560, %v564
          %v567 = vmul.f32 %v562, %v565
          %v568 = vld [vmem:[%s4] sm:$0xff]
          %v569 = vld [vmem:[%s4 + $0x8] sm:$0xff]
          %v570 = vadd.f32 %v566, %v568
          %v571 = vadd.f32 %v567, %v569
          %v572 = vmax.f32 %v570, 0.0
          %v573 = vmax.f32 %v571, 0.0
          %v574 = vpack.c.bf16 %v573, %v572
          %v575 = vld [vmem:[%s5] sm:$0xff]
          %v576 = vld [vmem:[%s5 + $0x8] sm:$0xff]
          %v577 = vld [vmem:[%s5 + $0x10] sm:$0xff]
          %v578 = vld [vmem:[%s5 + $0x18] sm:$0xff]
          %v579 = vld [vmem:[%s5 + $0x20] sm:$0xff]
          %v580 = vld [vmem:[%s5 + $0x28] sm:$0xff]
          %v581 = vld [vmem:[%s5 + $0x30] sm:$0xff]
          %v582 = vld [vmem:[%s5 + $0x38] sm:$0xff]
          %v583 = vld [vmem:[%s5 + $0x40] sm:$0xff]
          %v584 = vld [vmem:[%s5 + $0x48] sm:$0xff]
          %v585 = vld [vmem:[%s5 + $0x50] sm:$0xff]
          %v586 = vld [vmem:[%s5 + $0x58] sm:$0xff]
          %v587 = vld [vmem:[%s5 + $0x60] sm:$0xff]
          %v588 = vld [vmem:[%s5 + $0x68] sm:$0xff]
          %v589 = vld [vmem:[%s5 + $0x70] sm:$0xff]
          %v590 = vld [vmem:[%s5 + $0x78] sm:$0xff]
          %v607 = vunpack.c.l.b16 %v575
          %v608 = vunpack.c.h.b16 %v575
          %v609 = vunpack.c.l.b16 %v576
          %v610 = vunpack.c.h.b16 %v576
          %v611 = vunpack.c.l.b16 %v577
          %v612 = vunpack.c.h.b16 %v577
          %v613 = vunpack.c.l.b16 %v578
          %v614 = vunpack.c.h.b16 %v578
          %v615 = vunpack.c.l.b16 %v579
          %v616 = vunpack.c.h.b16 %v579
          %v617 = vunpack.c.l.b16 %v580
          %v618 = vunpack.c.h.b16 %v580
          %v619 = vunpack.c.l.b16 %v581
          %v620 = vunpack.c.h.b16 %v581
          %v621 = vunpack.c.l.b16 %v582
          %v622 = vunpack.c.h.b16 %v582
          %v623 = vunpack.c.l.b16 %v583
          %v624 = vunpack.c.h.b16 %v583
          %v625 = vunpack.c.l.b16 %v584
          %v626 = vunpack.c.h.b16 %v584
          %v627 = vunpack.c.l.b16 %v585
          %v628 = vunpack.c.h.b16 %v585
          %v629 = vunpack.c.l.b16 %v586
          %v630 = vunpack.c.h.b16 %v586
          %v631 = vunpack.c.l.b16 %v587
          %v632 = vunpack.c.h.b16 %v587
          %v633 = vunpack.c.l.b16 %v588
          %v634 = vunpack.c.h.b16 %v588
          %v635 = vunpack.c.l.b16 %v589
          %v636 = vunpack.c.h.b16 %v589
          %v637 = vunpack.c.l.b16 %v590
          %v638 = vunpack.c.h.b16 %v590
          %v639 = vpack.c.b16 %v609, %v607
          %v640 = vpack.c.b16 %v610, %v608
          %v641 = vpack.c.b16 %v613, %v611
          %v642 = vpack.c.b16 %v614, %v612
          %v643 = vpack.c.b16 %v617, %v615
          %v644 = vpack.c.b16 %v618, %v616
          %v645 = vpack.c.b16 %v621, %v619
          %v646 = vpack.c.b16 %v622, %v620
          %v647 = vpack.c.b16 %v625, %v623
          %v648 = vpack.c.b16 %v626, %v624
          %v649 = vpack.c.b16 %v629, %v627
          %v650 = vpack.c.b16 %v630, %v628
          %v651 = vpack.c.b16 %v633, %v631
          %v652 = vpack.c.b16 %v634, %v632
          %v653 = vpack.c.b16 %v637, %v635
          %v654 = vpack.c.b16 %v638, %v636
          %671 = vmatpush.bf16.msra.mxu0 %v653
          %672 = vmatpush.bf16.msra.mxu0 %v651
          %673 = vmatpush.bf16.msra.mxu0 %v649
          %674 = vmatpush.bf16.msra.mxu0 %v647
          %675 = vmatpush.bf16.msra.mxu0 %v645
          %676 = vmatpush.bf16.msra.mxu0 %v643
          %677 = vmatpush.bf16.msra.mxu0 %v641
          %678 = vmatpush.bf16.msra.mxu0 %v639
          %679 = vmatmul.bf16.gmra.mxu0 %v574
          %v680 = vpop.f32.mrf.mxu0
          %v681 = vadd.f32 0.0, %v680
          %v682 = vpop.f32.mrf.mxu0
          %v683 = vadd.f32 0.0, %v682
          %684 = vdwg.mxu0
          %685 = vmatpush.bf16.msra.mxu0 %v654
          %686 = vmatpush.bf16.msra.mxu0 %v652
          %687 = vmatpush.bf16.msra.mxu0 %v650
          %688 = vmatpush.bf16.msra.mxu0 %v648
          %689 = vmatpush.bf16.msra.mxu0 %v646
          %690 = vmatpush.bf16.msra.mxu0 %v644
          %691 = vmatpush.bf16.msra.mxu0 %v642
          %692 = vmatpush.bf16.msra.mxu0 %v640
          %693 = vmatmul.bf16.gmra.mxu0 %v574
          %v694 = vpop.f32.mrf.mxu0
          %v695 = vadd.f32 0.0, %v694
          %v696 = vpop.f32.mrf.mxu0
          %v697 = vadd.f32 0.0, %v696
          %698 = vdwg.mxu0
          %v699 = vld [vmem:[%s6] ss:$8 sm:$0x3]
          %700 = vrot.lane.b32.xlu0 %v351, 17
          %v701 = vpop.permute.xlu0 %700
          %702 = vrot.lane.b32.xlu0 %v353, 17
          %v703 = vpop.permute.xlu0 %702
          %704 = vrot.lane.b32.xlu0 %v352, 17
          %v705 = vpop.permute.xlu0 %704
          %706 = vrot.lane.b32.xlu0 %v354, 17
          %v707 = vpop.permute.xlu0 %706
          %v708 = vlaneseq
          %v709 = vand.u32 %v708, 127
          %vm710 = vcmp.lt.s32.totalorder %v709, 17
          %v711 = vsel %vm710, %v701, %v705
          %v712 = vsel %vm710, %v703, %v707
          %v713 = vsel %vm710, %v705, %v701
          %v714 = vsel %vm710, %v707, %v703
          %v716 = vperm.slane %v699, 0
          %v717 = vperm.slane %v699, 1
          %v720 = vmul.f32 %v713, %v716
          %v721 = vmul.f32 %v711, %v717
          %v722 = vmul.f32 %v714, %v716
          %v723 = vmul.f32 %v712, %v717
          %v724 = vpack.c.bf16 %v721, %v720
          %v725 = vpack.c.bf16 %v723, %v722
          %726 = vst [vmem:[#allocation2] sm:$0xff] %v724
          %727 = vst [vmem:[#allocation2 + $0x8] sm:$0xff] %v725
          %728 = vrot.lane.b32.xlu0 %v681, 17
          %v729 = vpop.permute.xlu0 %728
          %730 = vrot.lane.b32.xlu0 %v683, 17
          %v731 = vpop.permute.xlu0 %730
          %732 = vrot.lane.b32.xlu0 %v695, 17
          %v733 = vpop.permute.xlu0 %732
          %734 = vrot.lane.b32.xlu0 %v697, 17
          %v735 = vpop.permute.xlu0 %734
          %v736 = vsel %vm710, %v729, %v733
          %v737 = vsel %vm710, %v731, %v735
          %v738 = vsel %vm710, %v733, %v729
          %v739 = vsel %vm710, %v735, %v731
          %v740 = vmul.f32 %v738, %v716
          %v741 = vmul.f32 %v736, %v717
          %v742 = vmul.f32 %v739, %v716
          %v743 = vmul.f32 %v737, %v717
          %v744 = vpack.c.bf16 %v741, %v740
          %v745 = vpack.c.bf16 %v743, %v742
          %746 = vst [vmem:[#allocation2 + $0x10] sm:$0xff] %v744
          %747 = vst [vmem:[#allocation2 + $0x18] sm:$0xff] %v745
          %s748 = scalar_lea.vmem %s6, 1
          %v749 = vld [vmem:[%s748] ss:$8 sm:$0x3]
          %750 = vrot.lane.b32.xlu0 %v351, 16
          %v751 = vpop.permute.xlu0 %750
          %752 = vrot.lane.b32.xlu0 %v353, 16
          %v753 = vpop.permute.xlu0 %752
          %754 = vrot.lane.b32.xlu0 %v352, 16
          %v755 = vpop.permute.xlu0 %754
          %756 = vrot.lane.b32.xlu0 %v354, 16
          %v757 = vpop.permute.xlu0 %756
          %vm758 = vcmp.lt.s32.totalorder %v709, 16
          %v759 = vsel %vm758, %v751, %v755
          %v760 = vsel %vm758, %v753, %v757
          %v761 = vsel %vm758, %v755, %v751
          %v762 = vsel %vm758, %v757, %v753
          %v764 = vperm.slane %v749, 0
          %v765 = vperm.slane %v749, 1
          %v768 = vmul.f32 %v761, %v764
          %v769 = vmul.f32 %v759, %v765
          %v770 = vmul.f32 %v762, %v764
          %v771 = vmul.f32 %v760, %v765
          %v772 = vpack.c.bf16 %v769, %v768
          %v773 = vpack.c.bf16 %v771, %v770
          %774 = vst [vmem:[#allocation2 + $0x20] sm:$0xff] %v772
          %775 = vst [vmem:[#allocation2 + $0x28] sm:$0xff] %v773
          %776 = vrot.lane.b32.xlu0 %v681, 16
          %v777 = vpop.permute.xlu0 %776
          %778 = vrot.lane.b32.xlu0 %v683, 16
          %v779 = vpop.permute.xlu0 %778
          %780 = vrot.lane.b32.xlu0 %v695, 16
          %v781 = vpop.permute.xlu0 %780
          %782 = vrot.lane.b32.xlu0 %v697, 16
          %v783 = vpop.permute.xlu0 %782
          %v784 = vsel %vm758, %v777, %v781
          %v785 = vsel %vm758, %v779, %v783
          %v786 = vsel %vm758, %v781, %v777
          %v787 = vsel %vm758, %v783, %v779
          %v788 = vmul.f32 %v786, %v764
          %v789 = vmul.f32 %v784, %v765
          %v790 = vmul.f32 %v787, %v764
          %v791 = vmul.f32 %v785, %v765
          %v792 = vpack.c.bf16 %v789, %v788
          %v793 = vpack.c.bf16 %v791, %v790
          %794 = vst [vmem:[#allocation2 + $0x30] sm:$0xff] %v792
          %795 = vst [vmem:[#allocation2 + $0x38] sm:$0xff] %v793
          %s796 = scalar_lea.vmem %s6, 2
          %v797 = vld [vmem:[%s796] ss:$8 sm:$0x3]
          %798 = vrot.lane.b32.xlu0 %v351, 15
          %v799 = vpop.permute.xlu0 %798
          %800 = vrot.lane.b32.xlu0 %v353, 15
          %v801 = vpop.permute.xlu0 %800
          %802 = vrot.lane.b32.xlu0 %v352, 15
          %v803 = vpop.permute.xlu0 %802
          %804 = vrot.lane.b32.xlu0 %v354, 15
          %v805 = vpop.permute.xlu0 %804
          %vm806 = vcmp.lt.s32.totalorder %v709, 15
          %v807 = vsel %vm806, %v799, %v803
          %v808 = vsel %vm806, %v801, %v805
          %v809 = vsel %vm806, %v803, %v799
          %v810 = vsel %vm806, %v805, %v801
          %v812 = vperm.slane %v797, 0
          %v813 = vperm.slane %v797, 1
          %v816 = vmul.f32 %v809, %v812
          %v817 = vmul.f32 %v807, %v813
          %v818 = vmul.f32 %v810, %v812
          %v819 = vmul.f32 %v808, %v813
          %v820 = vpack.c.bf16 %v817, %v816
          %v821 = vpack.c.bf16 %v819, %v818
          %822 = vst [vmem:[#allocation2 + $0x40] sm:$0xff] %v820
          %823 = vst [vmem:[#allocation2 + $0x48] sm:$0xff] %v821
          %824 = vrot.lane.b32.xlu0 %v681, 15
          %v825 = vpop.permute.xlu0 %824
          %826 = vrot.lane.b32.xlu0 %v683, 15
          %v827 = vpop.permute.xlu0 %826
          %828 = vrot.lane.b32.xlu0 %v695, 15
          %v829 = vpop.permute.xlu0 %828
          %830 = vrot.lane.b32.xlu0 %v697, 15
          %v831 = vpop.permute.xlu0 %830
          %v832 = vsel %vm806, %v825, %v829
          %v833 = vsel %vm806, %v827, %v831
          %v834 = vsel %vm806, %v829, %v825
          %v835 = vsel %vm806, %v831, %v827
          %v836 = vmul.f32 %v834, %v812
          %v837 = vmul.f32 %v832, %v813
          %v838 = vmul.f32 %v835, %v812
          %v839 = vmul.f32 %v833, %v813
          %v840 = vpack.c.bf16 %v837, %v836
          %v841 = vpack.c.bf16 %v839, %v838
          %842 = vst [vmem:[#allocation2 + $0x50] sm:$0xff] %v840
          %843 = vst [vmem:[#allocation2 + $0x58] sm:$0xff] %v841
          %s844 = scalar_lea.vmem %s6, 3
          %v845 = vld [vmem:[%s844] ss:$8 sm:$0x3]
          %846 = vrot.lane.b32.xlu0 %v351, 1
          %v847 = vpop.permute.xlu0 %846
          %848 = vrot.lane.b32.xlu0 %v353, 1
          %v849 = vpop.permute.xlu0 %848
          %850 = vrot.lane.b32.xlu0 %v352, 1
          %v851 = vpop.permute.xlu0 %850
          %852 = vrot.lane.b32.xlu0 %v354, 1
          %v853 = vpop.permute.xlu0 %852
          %vm854 = vcmp.lt.s32.totalorder %v709, 1
          %v855 = vsel %vm854, %v847, %v851
          %v856 = vsel %vm854, %v849, %v853
          %v857 = vsel %vm854, %v851, %v847
          %v858 = vsel %vm854, %v853, %v849
          %v860 = vperm.slane %v845, 0
          %v861 = vperm.slane %v845, 1
          %v864 = vmul.f32 %v857, %v860
          %v865 = vmul.f32 %v855, %v861
          %v866 = vmul.f32 %v858, %v860
          %v867 = vmul.f32 %v856, %v861
          %v868 = vpack.c.bf16 %v865, %v864
          %v869 = vpack.c.bf16 %v867, %v866
          %870 = vst [vmem:[#allocation2 + $0x60] sm:$0xff] %v868
          %871 = vst [vmem:[#allocation2 + $0x68] sm:$0xff] %v869
          %872 = vrot.lane.b32.xlu0 %v681, 1
          %v873 = vpop.permute.xlu0 %872
          %874 = vrot.lane.b32.xlu0 %v683, 1
          %v875 = vpop.permute.xlu0 %874
          %876 = vrot.lane.b32.xlu0 %v695, 1
          %v877 = vpop.permute.xlu0 %876
          %878 = vrot.lane.b32.xlu0 %v697, 1
          %v879 = vpop.permute.xlu0 %878
          %v880 = vsel %vm854, %v873, %v877
          %v881 = vsel %vm854, %v875, %v879
          %v882 = vsel %vm854, %v877, %v873
          %v883 = vsel %vm854, %v879, %v875
          %v884 = vmul.f32 %v882, %v860
          %v885 = vmul.f32 %v880, %v861
          %v886 = vmul.f32 %v883, %v860
          %v887 = vmul.f32 %v881, %v861
          %v888 = vpack.c.bf16 %v885, %v884
          %v889 = vpack.c.bf16 %v887, %v886
          %890 = vst [vmem:[#allocation2 + $0x70] sm:$0xff] %v888
          %891 = vst [vmem:[#allocation2 + $0x78] sm:$0xff] %v889
          %892 = vst [vmem:[#allocation2 + $0x80] sm:$0xff] %v357
          %893 = vst [vmem:[#allocation2 + $0x88] sm:$0xff] %v358
          %v894 = vpack.c.bf16 %v695, %v681
          %v895 = vpack.c.bf16 %v697, %v683
          %896 = vst [vmem:[#allocation2 + $0x90] sm:$0xff] %v894
          %897 = vst [vmem:[#allocation2 + $0x98] sm:$0xff] %v895
          %s898 = scalar_lea.vmem %s6, 5
          %v899 = vld [vmem:[%s898] ss:$8 sm:$0x3]
          %900 = vrot.lane.b32.xlu0 %v351, 127
          %v901 = vpop.permute.xlu0 %900
          %902 = vrot.lane.b32.xlu0 %v353, 127
          %v903 = vpop.permute.xlu0 %902
          %904 = vrot.lane.b32.xlu0 %v352, 127
          %v905 = vpop.permute.xlu0 %904
          %906 = vrot.lane.b32.xlu0 %v354, 127
          %v907 = vpop.permute.xlu0 %906
          %vm908 = vcmp.lt.s32.totalorder %v709, 127
          %v909 = vsel %vm908, %v901, %v905
          %v910 = vsel %vm908, %v903, %v907
          %v911 = vsel %vm908, %v905, %v901
          %v912 = vsel %vm908, %v907, %v903
          %v914 = vperm.slane %v899, 0
          %v915 = vperm.slane %v899, 1
          %v918 = vmul.f32 %v909, %v914
          %v919 = vmul.f32 %v911, %v915
          %v920 = vmul.f32 %v910, %v914
          %v921 = vmul.f32 %v912, %v915
          %v922 = vpack.c.bf16 %v919, %v918
          %v923 = vpack.c.bf16 %v921, %v920
          %924 = vst [vmem:[#allocation2 + $0xa0] sm:$0xff] %v922
          %925 = vst [vmem:[#allocation2 + $0xa8] sm:$0xff] %v923
          %926 = vrot.lane.b32.xlu0 %v681, 127
          %v927 = vpop.permute.xlu0 %926
          %928 = vrot.lane.b32.xlu0 %v683, 127
          %v929 = vpop.permute.xlu0 %928
          %930 = vrot.lane.b32.xlu0 %v695, 127
          %v931 = vpop.permute.xlu0 %930
          %932 = vrot.lane.b32.xlu0 %v697, 127
          %v933 = vpop.permute.xlu0 %932
          %v934 = vsel %vm908, %v927, %v931
          %v935 = vsel %vm908, %v929, %v933
          %v936 = vsel %vm908, %v931, %v927
          %v937 = vsel %vm908, %v933, %v929
          %v938 = vmul.f32 %v934, %v914
          %v939 = vmul.f32 %v936, %v915
          %v940 = vmul.f32 %v935, %v914
          %v941 = vmul.f32 %v937, %v915
          %v942 = vpack.c.bf16 %v939, %v938
          %v943 = vpack.c.bf16 %v941, %v940
          %944 = vst [vmem:[#allocation2 + $0xb0] sm:$0xff] %v942
          %945 = vst [vmem:[#allocation2 + $0xb8] sm:$0xff] %v943
          %s946 = scalar_lea.vmem %s6, 6
          %v947 = vld [vmem:[%s946] ss:$8 sm:$0x3]
          %948 = vrot.lane.b32.xlu0 %v351, 113
          %v949 = vpop.permute.xlu0 %948
          %950 = vrot.lane.b32.xlu0 %v353, 113
          %v951 = vpop.permute.xlu0 %950
          %952 = vrot.lane.b32.xlu0 %v352, 113
          %v953 = vpop.permute.xlu0 %952
          %954 = vrot.lane.b32.xlu0 %v354, 113
          %v955 = vpop.permute.xlu0 %954
          %vm956 = vcmp.lt.s32.totalorder %v709, 113
          %v957 = vsel %vm956, %v949, %v953
          %v958 = vsel %vm956, %v951, %v955
          %v959 = vsel %vm956, %v953, %v949
          %v960 = vsel %vm956, %v955, %v951
          %v962 = vperm.slane %v947, 0
          %v963 = vperm.slane %v947, 1
          %v966 = vmul.f32 %v957, %v962
          %v967 = vmul.f32 %v959, %v963
          %v968 = vmul.f32 %v958, %v962
          %v969 = vmul.f32 %v960, %v963
          %v970 = vpack.c.bf16 %v967, %v966
          %v971 = vpack.c.bf16 %v969, %v968
          %972 = vst [vmem:[#allocation2 + $0xc0] sm:$0xff] %v970
          %973 = vst [vmem:[#allocation2 + $0xc8] sm:$0xff] %v971
          %974 = vrot.lane.b32.xlu0 %v681, 113
          %v975 = vpop.permute.xlu0 %974
          %976 = vrot.lane.b32.xlu0 %v683, 113
          %v977 = vpop.permute.xlu0 %976
          %978 = vrot.lane.b32.xlu0 %v695, 113
          %v979 = vpop.permute.xlu0 %978
          %980 = vrot.lane.b32.xlu0 %v697, 113
          %v981 = vpop.permute.xlu0 %980
          %v982 = vsel %vm956, %v975, %v979
          %v983 = vsel %vm956, %v977, %v981
          %v984 = vsel %vm956, %v979, %v975
          %v985 = vsel %vm956, %v981, %v977
          %v986 = vmul.f32 %v982, %v962
          %v987 = vmul.f32 %v984, %v963
          %v988 = vmul.f32 %v983, %v962
          %v989 = vmul.f32 %v985, %v963
          %v990 = vpack.c.bf16 %v987, %v986
          %v991 = vpack.c.bf16 %v989, %v988
          %992 = vst [vmem:[#allocation2 + $0xd0] sm:$0xff] %v990
          %993 = vst [vmem:[#allocation2 + $0xd8] sm:$0xff] %v991
          %s994 = scalar_lea.vmem %s6, 7
          %v995 = vld [vmem:[%s994] ss:$8 sm:$0x3]
          %996 = vrot.lane.b32.xlu0 %v351, 112
          %v997 = vpop.permute.xlu0 %996
          %998 = vrot.lane.b32.xlu0 %v353, 112
          %v999 = vpop.permute.xlu0 %998
          %1000 = vrot.lane.b32.xlu0 %v352, 112
          %v1001 = vpop.permute.xlu0 %1000
          %1002 = vrot.lane.b32.xlu0 %v354, 112
          %v1003 = vpop.permute.xlu0 %1002
          %vm1004 = vcmp.lt.s32.totalorder %v709, 112
          %v1005 = vsel %vm1004, %v997, %v1001
          %v1006 = vsel %vm1004, %v999, %v1003
          %v1007 = vsel %vm1004, %v1001, %v997
          %v1008 = vsel %vm1004, %v1003, %v999
          %v1010 = vperm.slane %v995, 0
          %v1011 = vperm.slane %v995, 1
          %v1014 = vmul.f32 %v1005, %v1010
          %v1015 = vmul.f32 %v1007, %v1011
          %v1016 = vmul.f32 %v1006, %v1010
          %v1017 = vmul.f32 %v1008, %v1011
          %v1018 = vpack.c.bf16 %v1015, %v1014
          %v1019 = vpack.c.bf16 %v1017, %v1016
          %1020 = vst [vmem:[#allocation2 + $0xe0] sm:$0xff] %v1018
          %1021 = vst [vmem:[#allocation2 + $0xe8] sm:$0xff] %v1019
          %1022 = vrot.lane.b32.xlu0 %v681, 112
          %v1023 = vpop.permute.xlu0 %1022
          %1024 = vrot.lane.b32.xlu0 %v683, 112
          %v1025 = vpop.permute.xlu0 %1024
          %1026 = vrot.lane.b32.xlu0 %v695, 112
          %v1027 = vpop.permute.xlu0 %1026
          %1028 = vrot.lane.b32.xlu0 %v697, 112
          %v1029 = vpop.permute.xlu0 %1028
          %v1030 = vsel %vm1004, %v1023, %v1027
          %v1031 = vsel %vm1004, %v1025, %v1029
          %v1032 = vsel %vm1004, %v1027, %v1023
          %v1033 = vsel %vm1004, %v1029, %v1025
          %v1034 = vmul.f32 %v1030, %v1010
          %v1035 = vmul.f32 %v1032, %v1011
          %v1036 = vmul.f32 %v1031, %v1010
          %v1037 = vmul.f32 %v1033, %v1011
          %v1038 = vpack.c.bf16 %v1035, %v1034
          %v1039 = vpack.c.bf16 %v1037, %v1036
          %1040 = vst [vmem:[#allocation2 + $0xf0] sm:$0xff] %v1038
          %1041 = vst [vmem:[#allocation2 + $0xf8] sm:$0xff] %v1039
          %s1042 = scalar_lea.vmem %s6, 16
          %v1043 = vld [vmem:[%s1042] ss:$8 sm:$0x3]
          %1044 = vrot.lane.b32.xlu0 %v351, 111
          %v1045 = vpop.permute.xlu0 %1044
          %1046 = vrot.lane.b32.xlu0 %v353, 111
          %v1047 = vpop.permute.xlu0 %1046
          %1048 = vrot.lane.b32.xlu0 %v352, 111
          %v1049 = vpop.permute.xlu0 %1048
          %1050 = vrot.lane.b32.xlu0 %v354, 111
          %v1051 = vpop.permute.xlu0 %1050
          %vm1052 = vcmp.lt.s32.totalorder %v709, 111
          %v1053 = vsel %vm1052, %v1045, %v1049
          %v1054 = vsel %vm1052, %v1047, %v1051
          %v1055 = vsel %vm1052, %v1049, %v1045
          %v1056 = vsel %vm1052, %v1051, %v1047
          %v1058 = vperm.slane %v1043, 0
          %v1059 = vperm.slane %v1043, 1
          %v1062 = vmul.f32 %v1053, %v1058
          %v1063 = vmul.f32 %v1055, %v1059
          %v1064 = vmul.f32 %v1054, %v1058
          %v1065 = vmul.f32 %v1056, %v1059
          %v1066 = vpack.c.bf16 %v1063, %v1062
          %v1067 = vpack.c.bf16 %v1065, %v1064
          %1068 = vst [vmem:[#allocation2 + $0x100] sm:$0xff] %v1066
          %1069 = vst [vmem:[#allocation2 + $0x108] sm:$0xff] %v1067
          %1070 = vrot.lane.b32.xlu0 %v681, 111
          %v1071 = vpop.permute.xlu0 %1070
          %1072 = vrot.lane.b32.xlu0 %v683, 111
          %v1073 = vpop.permute.xlu0 %1072
          %1074 = vrot.lane.b32.xlu0 %v695, 111
          %v1075 = vpop.permute.xlu0 %1074
          %1076 = vrot.lane.b32.xlu0 %v697, 111
          %v1077 = vpop.permute.xlu0 %1076
          %v1078 = vsel %vm1052, %v1071, %v1075
          %v1079 = vsel %vm1052, %v1073, %v1077
          %v1080 = vsel %vm1052, %v1075, %v1071
          %v1081 = vsel %vm1052, %v1077, %v1073
          %v1082 = vmul.f32 %v1078, %v1058
          %v1083 = vmul.f32 %v1080, %v1059
          %v1084 = vmul.f32 %v1079, %v1058
          %v1085 = vmul.f32 %v1081, %v1059
          %v1086 = vpack.c.bf16 %v1083, %v1082
          %v1087 = vpack.c.bf16 %v1085, %v1084
          %1088 = vst [vmem:[#allocation2 + $0x110] sm:$0xff] %v1086
          %1089 = vst [vmem:[#allocation2 + $0x118] sm:$0xff] %v1087
        $region60: #{tpu_custom_call.1} parent=55 // pred_fallthru
          _
        %s1090 = smul.u32 %s28, 256
        %s1091 = sshra.s32 %s1090, 3
        %s1092 = sand.u32 %s1090, 7
        %s1093 = smul.u32 %s1091, 3
        %s1094 = smul.addr %s1093, 4
        %s1095 = scalar_lea.vmem %s7, %s1094
        %v1096 = vld [vmem:[%s1095] sm:$0xff]
        %v1097 = vld [vmem:[%s1095 + $0x8] sm:$0xf]
        %v1098 = vld [vmem:[%s1095 + $0xc] sm:$0xff]
        %v1099 = vld [vmem:[%s1095 + $0x14] sm:$0xf]
        %v1100 = vld [vmem:[%s1095 + $0x18] sm:$0xff]
        %v1101 = vld [vmem:[%s1095 + $0x20] sm:$0xf]
        %v1102 = vld [vmem:[%s1095 + $0x24] sm:$0xff]
        %v1103 = vld [vmem:[%s1095 + $0x2c] sm:$0xf]
        %v1104 = vld [vmem:[%s1095 + $0x30] sm:$0xff]
        %v1105 = vld [vmem:[%s1095 + $0x38] sm:$0xf]
        %v1106 = vld [vmem:[%s1095 + $0x3c] sm:$0xff]
        %v1107 = vld [vmem:[%s1095 + $0x44] sm:$0xf]
        %v1108 = vld [vmem:[%s1095 + $0x48] sm:$0xff]
        %v1109 = vld [vmem:[%s1095 + $0x50] sm:$0xf]
        %v1110 = vld [vmem:[%s1095 + $0x54] sm:$0xff]
        %v1111 = vld [vmem:[%s1095 + $0x5c] sm:$0xf]
        %v1112 = vld [vmem:[%s1095 + $0x60] sm:$0xff]
        %v1113 = vld [vmem:[%s1095 + $0x68] sm:$0xf]
        %v1114 = vld [vmem:[%s1095 + $0x6c] sm:$0xff]
        %v1115 = vld [vmem:[%s1095 + $0x74] sm:$0xf]
        %v1116 = vld [vmem:[%s1095 + $0x78] sm:$0xff]
        %v1117 = vld [vmem:[%s1095 + $0x80] sm:$0xf]
        %v1118 = vld [vmem:[%s1095 + $0x84] sm:$0xff]
        %v1119 = vld [vmem:[%s1095 + $0x8c] sm:$0xf]
        %v1120 = vld [vmem:[%s1095 + $0x90] sm:$0xff]
        %v1121 = vld [vmem:[%s1095 + $0x98] sm:$0xf]
        %v1122 = vld [vmem:[%s1095 + $0x9c] sm:$0xff]
        %v1123 = vld [vmem:[%s1095 + $0xa4] sm:$0xf]
        %v1124 = vld [vmem:[%s1095 + $0xa8] sm:$0xff]
        %v1125 = vld [vmem:[%s1095 + $0xb0] sm:$0xf]
        %v1126 = vld [vmem:[%s1095 + $0xb4] sm:$0xff]
        %v1127 = vld [vmem:[%s1095 + $0xbc] sm:$0xf]
        %s1128 = scalar_lea.vmem %s8, %s1090
        %v1129 = vld [vmem:[%s1128] sm:$0xff]
        %v1130 = vld [vmem:[%s1128 + $0x8] sm:$0xff]
        %v1131 = vld [vmem:[%s1128 + $0x10] sm:$0xff]
        %v1132 = vld [vmem:[%s1128 + $0x18] sm:$0xff]
        %v1133 = vld [vmem:[%s1128 + $0x20] sm:$0xff]
        %v1134 = vld [vmem:[%s1128 + $0x28] sm:$0xff]
        %v1135 = vld [vmem:[%s1128 + $0x30] sm:$0xff]
        %v1136 = vld [vmem:[%s1128 + $0x38] sm:$0xff]
        %v1137 = vld [vmem:[%s1128 + $0x40] sm:$0xff]
        %v1138 = vld [vmem:[%s1128 + $0x48] sm:$0xff]
        %v1139 = vld [vmem:[%s1128 + $0x50] sm:$0xff]
        %v1140 = vld [vmem:[%s1128 + $0x58] sm:$0xff]
        %v1141 = vld [vmem:[%s1128 + $0x60] sm:$0xff]
        %v1142 = vld [vmem:[%s1128 + $0x68] sm:$0xff]
        %v1143 = vld [vmem:[%s1128 + $0x70] sm:$0xff]
        %v1144 = vld [vmem:[%s1128 + $0x78] sm:$0xff]
        %v1145 = vld [vmem:[#allocation2] sm:$0xff]
        %v1146 = vld [vmem:[#allocation2 + $0x8] sm:$0xff]
        %v1147 = vld [vmem:[#allocation2 + $0x10] sm:$0xff]
        %v1148 = vld [vmem:[#allocation2 + $0x18] sm:$0xff]
        %v1149 = vld [vmem:[#allocation2 + $0x20] sm:$0xff]
        %v1150 = vld [vmem:[#allocation2 + $0x28] sm:$0xff]
        %v1151 = vld [vmem:[#allocation2 + $0x30] sm:$0xff]
        %v1152 = vld [vmem:[#allocation2 + $0x38] sm:$0xff]
        %v1153 = vld [vmem:[#allocation2 + $0x40] sm:$0xff]
        %v1154 = vld [vmem:[#allocation2 + $0x48] sm:$0xff]
        %v1155 = vld [vmem:[#allocation2 + $0x50] sm:$0xff]
        %v1156 = vld [vmem:[#allocation2 + $0x58] sm:$0xff]
        %v1157 = vld [vmem:[#allocation2 + $0x60] sm:$0xff]
        %v1158 = vld [vmem:[#allocation2 + $0x68] sm:$0xff]
        %v1159 = vld [vmem:[#allocation2 + $0x70] sm:$0xff]
        %v1160 = vld [vmem:[#allocation2 + $0x78] sm:$0xff]
        %v1161 = vld [vmem:[#allocation2 + $0x80] sm:$0xff]
        %v1162 = vld [vmem:[#allocation2 + $0x88] sm:$0xff]
        %v1163 = vld [vmem:[#allocation2 + $0x90] sm:$0xff]
        %v1164 = vld [vmem:[#allocation2 + $0x98] sm:$0xff]
        %v1165 = vld [vmem:[#allocation2 + $0xa0] sm:$0xff]
        %v1166 = vld [vmem:[#allocation2 + $0xa8] sm:$0xff]
        %v1167 = vld [vmem:[#allocation2 + $0xb0] sm:$0xff]
        %v1168 = vld [vmem:[#allocation2 + $0xb8] sm:$0xff]
        %v1169 = vld [vmem:[#allocation2 + $0xc0] sm:$0xff]
        %v1170 = vld [vmem:[#allocation2 + $0xc8] sm:$0xff]
        %v1171 = vld [vmem:[#allocation2 + $0xd0] sm:$0xff]
        %v1172 = vld [vmem:[#allocation2 + $0xd8] sm:$0xff]
        %v1173 = vld [vmem:[#allocation2 + $0xe0] sm:$0xff]
        %v1174 = vld [vmem:[#allocation2 + $0xe8] sm:$0xff]
        %v1175 = vld [vmem:[#allocation2 + $0xf0] sm:$0xff]
        %v1176 = vld [vmem:[#allocation2 + $0xf8] sm:$0xff]
        %v1177 = vld [vmem:[#allocation2 + $0x100] sm:$0xff]
        %v1178 = vld [vmem:[#allocation2 + $0x108] sm:$0xff]
        %v1179 = vld [vmem:[#allocation2 + $0x110] sm:$0xff]
        %v1180 = vld [vmem:[#allocation2 + $0x118] sm:$0xff]
        %1182 = vset.pattern.permute.xlu0 0
        %1183 = vperm.xlu0 %1182, %v1129
        %v1184 = vpop.permute.xlu0 %1183
        %1187 = vset.pattern.permute.xlu0 0
        %1188 = vperm.xlu0 %1187, %v1130
        %v1189 = vpop.permute.xlu0 %1188
        %1192 = vset.pattern.permute.xlu0 0
        %1193 = vperm.xlu0 %1192, %v1131
        %v1194 = vpop.permute.xlu0 %1193
        %1197 = vset.pattern.permute.xlu0 0
        %1198 = vperm.xlu0 %1197, %v1132
        %v1199 = vpop.permute.xlu0 %1198
        %1202 = vset.pattern.permute.xlu0 0
        %1203 = vperm.xlu0 %1202, %v1133
        %v1204 = vpop.permute.xlu0 %1203
        %1207 = vset.pattern.permute.xlu0 0
        %1208 = vperm.xlu0 %1207, %v1134
        %v1209 = vpop.permute.xlu0 %1208
        %1212 = vset.pattern.permute.xlu0 0
        %1213 = vperm.xlu0 %1212, %v1135
        %v1214 = vpop.permute.xlu0 %1213
        %1217 = vset.pattern.permute.xlu0 0
        %1218 = vperm.xlu0 %1217, %v1136
        %v1219 = vpop.permute.xlu0 %1218
        %1222 = vset.pattern.permute.xlu0 0
        %1223 = vperm.xlu0 %1222, %v1137
        %v1224 = vpop.permute.xlu0 %1223
        %1227 = vset.pattern.permute.xlu0 0
        %1228 = vperm.xlu0 %1227, %v1138
        %v1229 = vpop.permute.xlu0 %1228
        %1232 = vset.pattern.permute.xlu0 0
        %1233 = vperm.xlu0 %1232, %v1139
        %v1234 = vpop.permute.xlu0 %1233
        %1237 = vset.pattern.permute.xlu0 0
        %1238 = vperm.xlu0 %1237, %v1140
        %v1239 = vpop.permute.xlu0 %1238
        %1242 = vset.pattern.permute.xlu0 0
        %1243 = vperm.xlu0 %1242, %v1141
        %v1244 = vpop.permute.xlu0 %1243
        %1247 = vset.pattern.permute.xlu0 0
        %1248 = vperm.xlu0 %1247, %v1142
        %v1249 = vpop.permute.xlu0 %1248
        %1252 = vset.pattern.permute.xlu0 0
        %1253 = vperm.xlu0 %1252, %v1143
        %v1254 = vpop.permute.xlu0 %1253
        %1257 = vset.pattern.permute.xlu0 0
        %1258 = vperm.xlu0 %1257, %v1144
        %v1259 = vpop.permute.xlu0 %1258
        %v1293 = vunpack.c.l.b16 %v1096
        %v1294 = vunpack.c.h.b16 %v1096
        %v1295 = vunpack.c.l.b16 %v1097
        %v1296 = vunpack.c.l.b16 %v1098
        %v1297 = vunpack.c.h.b16 %v1098
        %v1298 = vunpack.c.l.b16 %v1099
        %v1299 = vunpack.c.l.b16 %v1100
        %v1300 = vunpack.c.h.b16 %v1100
        %v1301 = vunpack.c.l.b16 %v1101
        %v1302 = vunpack.c.l.b16 %v1102
        %v1303 = vunpack.c.h.b16 %v1102
        %v1304 = vunpack.c.l.b16 %v1103
        %v1305 = vunpack.c.l.b16 %v1104
        %v1306 = vunpack.c.h.b16 %v1104
        %v1307 = vunpack.c.l.b16 %v1105
        %v1308 = vunpack.c.l.b16 %v1106
        %v1309 = vunpack.c.h.b16 %v1106
        %v1310 = vunpack.c.l.b16 %v1107
        %v1311 = vunpack.c.l.b16 %v1108
        %v1312 = vunpack.c.h.b16 %v1108
        %v1313 = vunpack.c.l.b16 %v1109
        %v1314 = vunpack.c.l.b16 %v1110
        %v1315 = vunpack.c.h.b16 %v1110
        %v1316 = vunpack.c.l.b16 %v1111
        %v1317 = vunpack.c.l.b16 %v1112
        %v1318 = vunpack.c.h.b16 %v1112
        %v1319 = vunpack.c.l.b16 %v1113
        %v1320 = vunpack.c.l.b16 %v1114
        %v1321 = vunpack.c.h.b16 %v1114
        %v1322 = vunpack.c.l.b16 %v1115
        %v1323 = vunpack.c.l.b16 %v1116
        %v1324 = vunpack.c.h.b16 %v1116
        %v1325 = vunpack.c.l.b16 %v1117
        %v1326 = vunpack.c.l.b16 %v1118
        %v1327 = vunpack.c.h.b16 %v1118
        %v1328 = vunpack.c.l.b16 %v1119
        %v1329 = vunpack.c.l.b16 %v1120
        %v1330 = vunpack.c.h.b16 %v1120
        %v1331 = vunpack.c.l.b16 %v1121
        %v1332 = vunpack.c.l.b16 %v1122
        %v1333 = vunpack.c.h.b16 %v1122
        %v1334 = vunpack.c.l.b16 %v1123
        %v1335 = vunpack.c.l.b16 %v1124
        %v1336 = vunpack.c.h.b16 %v1124
        %v1337 = vunpack.c.l.b16 %v1125
        %v1338 = vunpack.c.l.b16 %v1126
        %v1339 = vunpack.c.h.b16 %v1126
        %v1340 = vunpack.c.l.b16 %v1127
        %v1341 = vpack.c.b16 %v1296, %v1293
        %v1342 = vpack.c.b16 %v1297, %v1294
        %v1343 = vpack.c.b16 %v1298, %v1295
        %v1344 = vpack.c.b16 %v1302, %v1299
        %v1345 = vpack.c.b16 %v1303, %v1300
        %v1346 = vpack.c.b16 %v1304, %v1301
        %v1347 = vpack.c.b16 %v1308, %v1305
        %v1348 = vpack.c.b16 %v1309, %v1306
        %v1349 = vpack.c.b16 %v1310, %v1307
        %v1350 = vpack.c.b16 %v1314, %v1311
        %v1351 = vpack.c.b16 %v1315, %v1312
        %v1352 = vpack.c.b16 %v1316, %v1313
        %v1353 = vpack.c.b16 %v1320, %v1317
        %v1354 = vpack.c.b16 %v1321, %v1318
        %v1355 = vpack.c.b16 %v1322, %v1319
        %v1356 = vpack.c.b16 %v1326, %v1323
        %v1357 = vpack.c.b16 %v1327, %v1324
        %v1358 = vpack.c.b16 %v1328, %v1325
        %v1359 = vpack.c.b16 %v1332, %v1329
        %v1360 = vpack.c.b16 %v1333, %v1330
        %v1361 = vpack.c.b16 %v1334, %v1331
        %v1362 = vpack.c.b16 %v1338, %v1335
        %v1363 = vpack.c.b16 %v1339, %v1336
        %v1364 = vpack.c.b16 %v1340, %v1337
        %v1417 = vunpack.c.l.b16 %v1145
        %v1418 = vunpack.c.h.b16 %v1145
        %v1419 = vunpack.c.l.b16 %v1146
        %v1420 = vunpack.c.h.b16 %v1146
        %v1421 = vunpack.c.l.b16 %v1147
        %v1422 = vunpack.c.h.b16 %v1147
        %v1423 = vunpack.c.l.b16 %v1148
        %v1424 = vunpack.c.h.b16 %v1148
        %v1425 = vunpack.c.l.b16 %v1149
        %v1426 = vunpack.c.h.b16 %v1149
        %v1427 = vunpack.c.l.b16 %v1150
        %v1428 = vunpack.c.h.b16 %v1150
        %v1429 = vunpack.c.l.b16 %v1151
        %v1430 = vunpack.c.h.b16 %v1151
        %v1431 = vunpack.c.l.b16 %v1152
        %v1432 = vunpack.c.h.b16 %v1152
        %v1433 = vunpack.c.l.b16 %v1153
        %v1434 = vunpack.c.h.b16 %v1153
        %v1435 = vunpack.c.l.b16 %v1154
        %v1436 = vunpack.c.h.b16 %v1154
        %v1437 = vunpack.c.l.b16 %v1155
        %v1438 = vunpack.c.h.b16 %v1155
        %v1439 = vunpack.c.l.b16 %v1156
        %v1440 = vunpack.c.h.b16 %v1156
        %v1441 = vunpack.c.l.b16 %v1157
        %v1442 = vunpack.c.h.b16 %v1157
        %v1443 = vunpack.c.l.b16 %v1158
        %v1444 = vunpack.c.h.b16 %v1158
        %v1445 = vunpack.c.l.b16 %v1159
        %v1446 = vunpack.c.h.b16 %v1159
        %v1447 = vunpack.c.l.b16 %v1160
        %v1448 = vunpack.c.h.b16 %v1160
        %v1449 = vunpack.c.l.b16 %v1161
        %v1450 = vunpack.c.h.b16 %v1161
        %v1451 = vunpack.c.l.b16 %v1162
        %v1452 = vunpack.c.h.b16 %v1162
        %v1453 = vunpack.c.l.b16 %v1163
        %v1454 = vunpack.c.h.b16 %v1163
        %v1455 = vunpack.c.l.b16 %v1164
        %v1456 = vunpack.c.h.b16 %v1164
        %v1457 = vunpack.c.l.b16 %v1165
        %v1458 = vunpack.c.h.b16 %v1165
        %v1459 = vunpack.c.l.b16 %v1166
        %v1460 = vunpack.c.h.b16 %v1166
        %v1461 = vunpack.c.l.b16 %v1167
        %v1462 = vunpack.c.h.b16 %v1167
        %v1463 = vunpack.c.l.b16 %v1168
        %v1464 = vunpack.c.h.b16 %v1168
        %v1465 = vunpack.c.l.b16 %v1169
        %v1466 = vunpack.c.h.b16 %v1169
        %v1467 = vunpack.c.l.b16 %v1170
        %v1468 = vunpack.c.h.b16 %v1170
        %v1469 = vunpack.c.l.b16 %v1171
        %v1470 = vunpack.c.h.b16 %v1171
        %v1471 = vunpack.c.l.b16 %v1172
        %v1472 = vunpack.c.h.b16 %v1172
        %v1473 = vunpack.c.l.b16 %v1173
        %v1474 = vunpack.c.h.b16 %v1173
        %v1475 = vunpack.c.l.b16 %v1174
        %v1476 = vunpack.c.h.b16 %v1174
        %v1477 = vunpack.c.l.b16 %v1175
        %v1478 = vunpack.c.h.b16 %v1175
        %v1479 = vunpack.c.l.b16 %v1176
        %v1480 = vunpack.c.h.b16 %v1176
        %v1481 = vunpack.c.l.b16 %v1177
        %v1482 = vunpack.c.h.b16 %v1177
        %v1483 = vunpack.c.l.b16 %v1178
        %v1484 = vunpack.c.h.b16 %v1178
        %v1485 = vunpack.c.l.b16 %v1179
        %v1486 = vunpack.c.h.b16 %v1179
        %v1487 = vunpack.c.l.b16 %v1180
        %v1488 = vunpack.c.h.b16 %v1180
        %v1489 = vpack.c.b16 %v1419, %v1417
        %v1490 = vpack.c.b16 %v1420, %v1418
        %v1491 = vpack.c.b16 %v1423, %v1421
        %v1492 = vpack.c.b16 %v1424, %v1422
        %v1493 = vpack.c.b16 %v1427, %v1425
        %v1494 = vpack.c.b16 %v1428, %v1426
        %v1495 = vpack.c.b16 %v1431, %v1429
        %v1496 = vpack.c.b16 %v1432, %v1430
        %v1497 = vpack.c.b16 %v1435, %v1433
        %v1498 = vpack.c.b16 %v1436, %v1434
        %v1499 = vpack.c.b16 %v1439, %v1437
        %v1500 = vpack.c.b16 %v1440, %v1438
        %v1501 = vpack.c.b16 %v1443, %v1441
        %v1502 = vpack.c.b16 %v1444, %v1442
        %v1503 = vpack.c.b16 %v1447, %v1445
        %v1504 = vpack.c.b16 %v1448, %v1446
        %v1505 = vpack.c.b16 %v1451, %v1449
        %v1506 = vpack.c.b16 %v1452, %v1450
        %v1507 = vpack.c.b16 %v1455, %v1453
        %v1508 = vpack.c.b16 %v1456, %v1454
        %v1509 = vpack.c.b16 %v1459, %v1457
        %v1510 = vpack.c.b16 %v1460, %v1458
        %v1511 = vpack.c.b16 %v1463, %v1461
        %v1512 = vpack.c.b16 %v1464, %v1462
        %v1513 = vpack.c.b16 %v1467, %v1465
        %v1514 = vpack.c.b16 %v1468, %v1466
        %v1515 = vpack.c.b16 %v1471, %v1469
        %v1516 = vpack.c.b16 %v1472, %v1470
        %v1517 = vpack.c.b16 %v1475, %v1473
        %v1518 = vpack.c.b16 %v1476, %v1474
        %v1519 = vpack.c.b16 %v1479, %v1477
        %v1520 = vpack.c.b16 %v1480, %v1478
        %v1521 = vpack.c.b16 %v1483, %v1481
        %v1522 = vpack.c.b16 %v1484, %v1482
        %v1523 = vpack.c.b16 %v1487, %v1485
        %v1524 = vpack.c.b16 %v1488, %v1486
        %vm1561 = vcmask 261120
        %v1563 = vsel %vm1561, %v1343, 0
        %v1566 = vsel %vm1561, %v1346, 0
        %v1569 = vsel %vm1561, %v1349, 0
        %v1572 = vsel %vm1561, %v1352, 0
        %v1575 = vsel %vm1561, %v1355, 0
        %v1578 = vsel %vm1561, %v1358, 0
        %v1581 = vsel %vm1561, %v1361, 0
        %v1584 = vsel %vm1561, %v1364, 0
        %1586 = vmatpush.bf16.msra.mxu0 %v1503
        %1587 = vmatpush.bf16.msra.mxu0 %v1501
        %1588 = vmatpush.bf16.msra.mxu0 %v1499
        %1589 = vmatpush.bf16.msra.mxu0 %v1497
        %1590 = vmatpush.bf16.msra.mxu0 %v1495
        %1591 = vmatpush.bf16.msra.mxu0 %v1493
        %1592 = vmatpush.bf16.msra.mxu0 %v1491
        %1593 = vmatpush.bf16.msra.mxu0 %v1489
        %1594 = vmatmul.bf16.gmra.mxu0 %v1341
        %v1595 = vpop.f32.mrf.mxu0
        %v1596 = vadd.f32 %v1184, %v1595
        %v1597 = vpop.f32.mrf.mxu0
        %v1598 = vadd.f32 %v1189, %v1597
        %1599 = vmatmul.bf16.gmra.mxu0 %v1344
        %v1600 = vpop.f32.mrf.mxu0
        %v1601 = vadd.f32 %v1194, %v1600
        %v1602 = vpop.f32.mrf.mxu0
        %v1603 = vadd.f32 %v1199, %v1602
        %1604 = vmatmul.bf16.gmra.mxu0 %v1347
        %v1605 = vpop.f32.mrf.mxu0
        %v1606 = vadd.f32 %v1204, %v1605
        %v1607 = vpop.f32.mrf.mxu0
        %v1608 = vadd.f32 %v1209, %v1607
        %1609 = vmatmul.bf16.gmra.mxu0 %v1350
        %v1610 = vpop.f32.mrf.mxu0
        %v1611 = vadd.f32 %v1214, %v1610
        %v1612 = vpop.f32.mrf.mxu0
        %v1613 = vadd.f32 %v1219, %v1612
        %1614 = vmatmul.bf16.gmra.mxu0 %v1353
        %v1615 = vpop.f32.mrf.mxu0
        %v1616 = vadd.f32 %v1224, %v1615
        %v1617 = vpop.f32.mrf.mxu0
        %v1618 = vadd.f32 %v1229, %v1617
        %1619 = vmatmul.bf16.gmra.mxu0 %v1356
        %v1620 = vpop.f32.mrf.mxu0
        %v1621 = vadd.f32 %v1234, %v1620
        %v1622 = vpop.f32.mrf.mxu0
        %v1623 = vadd.f32 %v1239, %v1622
        %1624 = vmatmul.bf16.gmra.mxu0 %v1359
        %v1625 = vpop.f32.mrf.mxu0
        %v1626 = vadd.f32 %v1244, %v1625
        %v1627 = vpop.f32.mrf.mxu0
        %v1628 = vadd.f32 %v1249, %v1627
        %1629 = vmatmul.bf16.gmra.mxu0 %v1362
        %v1630 = vpop.f32.mrf.mxu0
        %v1631 = vadd.f32 %v1254, %v1630
        %v1632 = vpop.f32.mrf.mxu0
        %v1633 = vadd.f32 %v1259, %v1632
        %1634 = vdwg.mxu0
        %1635 = vmatpush.bf16.msra.mxu0 %v1519
        %1636 = vmatpush.bf16.msra.mxu0 %v1517
        %1637 = vmatpush.bf16.msra.mxu0 %v1515
        %1638 = vmatpush.bf16.msra.mxu0 %v1513
        %1639 = vmatpush.bf16.msra.mxu0 %v1511
        %1640 = vmatpush.bf16.msra.mxu0 %v1509
        %1641 = vmatpush.bf16.msra.mxu0 %v1507
        %1642 = vmatpush.bf16.msra.mxu0 %v1505
        %1643 = vmatmul.bf16.gmra.mxu0 %v1342
        %v1644 = vpop.f32.mrf.mxu0
        %v1645 = vadd.f32 %v1596, %v1644
        %v1646 = vpop.f32.mrf.mxu0
        %v1647 = vadd.f32 %v1598, %v1646
        %1648 = vmatmul.bf16.gmra.mxu0 %v1345
        %v1649 = vpop.f32.mrf.mxu0
        %v1650 = vadd.f32 %v1601, %v1649
        %v1651 = vpop.f32.mrf.mxu0
        %v1652 = vadd.f32 %v1603, %v1651
        %1653 = vmatmul.bf16.gmra.mxu0 %v1348
        %v1654 = vpop.f32.mrf.mxu0
        %v1655 = vadd.f32 %v1606, %v1654
        %v1656 = vpop.f32.mrf.mxu0
        %v1657 = vadd.f32 %v1608, %v1656
        %1658 = vmatmul.bf16.gmra.mxu0 %v1351
        %v1659 = vpop.f32.mrf.mxu0
        %v1660 = vadd.f32 %v1611, %v1659
        %v1661 = vpop.f32.mrf.mxu0
        %v1662 = vadd.f32 %v1613, %v1661
        %1663 = vmatmul.bf16.gmra.mxu0 %v1354
        %v1664 = vpop.f32.mrf.mxu0
        %v1665 = vadd.f32 %v1616, %v1664
        %v1666 = vpop.f32.mrf.mxu0
        %v1667 = vadd.f32 %v1618, %v1666
        %1668 = vmatmul.bf16.gmra.mxu0 %v1357
        %v1669 = vpop.f32.mrf.mxu0
        %v1670 = vadd.f32 %v1621, %v1669
        %v1671 = vpop.f32.mrf.mxu0
        %v1672 = vadd.f32 %v1623, %v1671
        %1673 = vmatmul.bf16.gmra.mxu0 %v1360
        %v1674 = vpop.f32.mrf.mxu0
        %v1675 = vadd.f32 %v1626, %v1674
        %v1676 = vpop.f32.mrf.mxu0
        %v1677 = vadd.f32 %v1628, %v1676
        %1678 = vmatmul.bf16.gmra.mxu0 %v1363
        %v1679 = vpop.f32.mrf.mxu0
        %v1680 = vadd.f32 %v1631, %v1679
        %v1681 = vpop.f32.mrf.mxu0
        %v1682 = vadd.f32 %v1633, %v1681
        %1683 = vdwg.mxu0
        %1684 = vmatpush.bf16.msra.mxu0 0
        %1685 = vmatpush.bf16.msra.mxu0 0
        %1686 = vmatpush.bf16.msra.mxu0 0
        %1687 = vmatpush.bf16.msra.mxu0 0
        %1688 = vmatpush.bf16.msra.mxu0 0
        %1689 = vmatpush.bf16.msra.mxu0 0
        %1690 = vmatpush.bf16.msra.mxu0 %v1523
        %1691 = vmatpush.bf16.msra.mxu0 %v1521
        %1692 = vmatmul.bf16.gmra.mxu0 %v1563
        %v1693 = vpop.f32.mrf.mxu0
        %v1694 = vadd.f32 %v1645, %v1693
        %v1695 = vpop.f32.mrf.mxu0
        %v1696 = vadd.f32 %v1647, %v1695
        %1697 = vmatmul.bf16.gmra.mxu0 %v1566
        %v1698 = vpop.f32.mrf.mxu0
        %v1699 = vadd.f32 %v1650, %v1698
        %v1700 = vpop.f32.mrf.mxu0
        %v1701 = vadd.f32 %v1652, %v1700
        %1702 = vmatmul.bf16.gmra.mxu0 %v1569
        %v1703 = vpop.f32.mrf.mxu0
        %v1704 = vadd.f32 %v1655, %v1703
        %v1705 = vpop.f32.mrf.mxu0
        %v1706 = vadd.f32 %v1657, %v1705
        %1707 = vmatmul.bf16.gmra.mxu0 %v1572
        %v1708 = vpop.f32.mrf.mxu0
        %v1709 = vadd.f32 %v1660, %v1708
        %v1710 = vpop.f32.mrf.mxu0
        %v1711 = vadd.f32 %v1662, %v1710
        %1712 = vmatmul.bf16.gmra.mxu0 %v1575
        %v1713 = vpop.f32.mrf.mxu0
        %v1714 = vadd.f32 %v1665, %v1713
        %v1715 = vpop.f32.mrf.mxu0
        %v1716 = vadd.f32 %v1667, %v1715
        %1717 = vmatmul.bf16.gmra.mxu0 %v1578
        %v1718 = vpop.f32.mrf.mxu0
        %v1719 = vadd.f32 %v1670, %v1718
        %v1720 = vpop.f32.mrf.mxu0
        %v1721 = vadd.f32 %v1672, %v1720
        %1722 = vmatmul.bf16.gmra.mxu0 %v1581
        %v1723 = vpop.f32.mrf.mxu0
        %v1724 = vadd.f32 %v1675, %v1723
        %v1725 = vpop.f32.mrf.mxu0
        %v1726 = vadd.f32 %v1677, %v1725
        %1727 = vmatmul.bf16.gmra.mxu0 %v1584
        %v1728 = vpop.f32.mrf.mxu0
        %v1729 = vadd.f32 %v1680, %v1728
        %v1730 = vpop.f32.mrf.mxu0
        %v1731 = vadd.f32 %v1682, %v1730
        %1732 = vdwg.mxu0
        %1733 = vmatpush.bf16.msra.mxu0 %v1504
        %1734 = vmatpush.bf16.msra.mxu0 %v1502
        %1735 = vmatpush.bf16.msra.mxu0 %v1500
        %1736 = vmatpush.bf16.msra.mxu0 %v1498
        %1737 = vmatpush.bf16.msra.mxu0 %v1496
        %1738 = vmatpush.bf16.msra.mxu0 %v1494
        %1739 = vmatpush.bf16.msra.mxu0 %v1492
        %1740 = vmatpush.bf16.msra.mxu0 %v1490
        %1741 = vmatmul.bf16.gmra.mxu0 %v1341
        %v1742 = vpop.f32.mrf.mxu0
        %v1743 = vadd.f32 %v1184, %v1742
        %v1744 = vpop.f32.mrf.mxu0
        %v1745 = vadd.f32 %v1189, %v1744
        %1746 = vmatmul.bf16.gmra.mxu0 %v1344
        %v1747 = vpop.f32.mrf.mxu0
        %v1748 = vadd.f32 %v1194, %v1747
        %v1749 = vpop.f32.mrf.mxu0
        %v1750 = vadd.f32 %v1199, %v1749
        %1751 = vmatmul.bf16.gmra.mxu0 %v1347
        %v1752 = vpop.f32.mrf.mxu0
        %v1753 = vadd.f32 %v1204, %v1752
        %v1754 = vpop.f32.mrf.mxu0
        %v1755 = vadd.f32 %v1209, %v1754
        %1756 = vmatmul.bf16.gmra.mxu0 %v1350
        %v1757 = vpop.f32.mrf.mxu0
        %v1758 = vadd.f32 %v1214, %v1757
        %v1759 = vpop.f32.mrf.mxu0
        %v1760 = vadd.f32 %v1219, %v1759
        %1761 = vmatmul.bf16.gmra.mxu0 %v1353
        %v1762 = vpop.f32.mrf.mxu0
        %v1763 = vadd.f32 %v1224, %v1762
        %v1764 = vpop.f32.mrf.mxu0
        %v1765 = vadd.f32 %v1229, %v1764
        %1766 = vmatmul.bf16.gmra.mxu0 %v1356
        %v1767 = vpop.f32.mrf.mxu0
        %v1768 = vadd.f32 %v1234, %v1767
        %v1769 = vpop.f32.mrf.mxu0
        %v1770 = vadd.f32 %v1239, %v1769
        %1771 = vmatmul.bf16.gmra.mxu0 %v1359
        %v1772 = vpop.f32.mrf.mxu0
        %v1773 = vadd.f32 %v1244, %v1772
        %v1774 = vpop.f32.mrf.mxu0
        %v1775 = vadd.f32 %v1249, %v1774
        %1776 = vmatmul.bf16.gmra.mxu0 %v1362
        %v1777 = vpop.f32.mrf.mxu0
        %v1778 = vadd.f32 %v1254, %v1777
        %v1779 = vpop.f32.mrf.mxu0
        %v1780 = vadd.f32 %v1259, %v1779
        %1781 = vdwg.mxu0
        %1782 = vmatpush.bf16.msra.mxu0 %v1520
        %1783 = vmatpush.bf16.msra.mxu0 %v1518
        %1784 = vmatpush.bf16.msra.mxu0 %v1516
        %1785 = vmatpush.bf16.msra.mxu0 %v1514
        %1786 = vmatpush.bf16.msra.mxu0 %v1512
        %1787 = vmatpush.bf16.msra.mxu0 %v1510
        %1788 = vmatpush.bf16.msra.mxu0 %v1508
        %1789 = vmatpush.bf16.msra.mxu0 %v1506
        %1790 = vmatmul.bf16.gmra.mxu0 %v1342
        %v1791 = vpop.f32.mrf.mxu0
        %v1792 = vadd.f32 %v1743, %v1791
        %v1793 = vpop.f32.mrf.mxu0
        %v1794 = vadd.f32 %v1745, %v1793
        %1795 = vmatmul.bf16.gmra.mxu0 %v1345
        %v1796 = vpop.f32.mrf.mxu0
        %v1797 = vadd.f32 %v1748, %v1796
        %v1798 = vpop.f32.mrf.mxu0
        %v1799 = vadd.f32 %v1750, %v1798
        %1800 = vmatmul.bf16.gmra.mxu0 %v1348
        %v1801 = vpop.f32.mrf.mxu0
        %v1802 = vadd.f32 %v1753, %v1801
        %v1803 = vpop.f32.mrf.mxu0
        %v1804 = vadd.f32 %v1755, %v1803
        %1805 = vmatmul.bf16.gmra.mxu0 %v1351
        %v1806 = vpop.f32.mrf.mxu0
        %v1807 = vadd.f32 %v1758, %v1806
        %v1808 = vpop.f32.mrf.mxu0
        %v1809 = vadd.f32 %v1760, %v1808
        %1810 = vmatmul.bf16.gmra.mxu0 %v1354
        %v1811 = vpop.f32.mrf.mxu0
        %v1812 = vadd.f32 %v1763, %v1811
        %v1813 = vpop.f32.mrf.mxu0
        %v1814 = vadd.f32 %v1765, %v1813
        %1815 = vmatmul.bf16.gmra.mxu0 %v1357
        %v1816 = vpop.f32.mrf.mxu0
        %v1817 = vadd.f32 %v1768, %v1816
        %v1818 = vpop.f32.mrf.mxu0
        %v1819 = vadd.f32 %v1770, %v1818
        %1820 = vmatmul.bf16.gmra.mxu0 %v1360
        %v1821 = vpop.f32.mrf.mxu0
        %v1822 = vadd.f32 %v1773, %v1821
        %v1823 = vpop.f32.mrf.mxu0
        %v1824 = vadd.f32 %v1775, %v1823
        %1825 = vmatmul.bf16.gmra.mxu0 %v1363
        %v1826 = vpop.f32.mrf.mxu0
        %v1827 = vadd.f32 %v1778, %v1826
        %v1828 = vpop.f32.mrf.mxu0
        %v1829 = vadd.f32 %v1780, %v1828
        %1830 = vdwg.mxu0
        %1831 = vmatpush.bf16.msra.mxu0 0
        %1832 = vmatpush.bf16.msra.mxu0 0
        %1833 = vmatpush.bf16.msra.mxu0 0
        %1834 = vmatpush.bf16.msra.mxu0 0
        %1835 = vmatpush.bf16.msra.mxu0 0
        %1836 = vmatpush.bf16.msra.mxu0 0
        %1837 = vmatpush.bf16.msra.mxu0 %v1524
        %1838 = vmatpush.bf16.msra.mxu0 %v1522
        %1839 = vmatmul.bf16.gmra.mxu0 %v1563
        %v1840 = vpop.f32.mrf.mxu0
        %v1841 = vadd.f32 %v1792, %v1840
        %v1842 = vpop.f32.mrf.mxu0
        %v1843 = vadd.f32 %v1794, %v1842
        %1844 = vmatmul.bf16.gmra.mxu0 %v1566
        %v1845 = vpop.f32.mrf.mxu0
        %v1846 = vadd.f32 %v1797, %v1845
        %v1847 = vpop.f32.mrf.mxu0
        %v1848 = vadd.f32 %v1799, %v1847
        %1849 = vmatmul.bf16.gmra.mxu0 %v1569
        %v1850 = vpop.f32.mrf.mxu0
        %v1851 = vadd.f32 %v1802, %v1850
        %v1852 = vpop.f32.mrf.mxu0
        %v1853 = vadd.f32 %v1804, %v1852
        %1854 = vmatmul.bf16.gmra.mxu0 %v1572
        %v1855 = vpop.f32.mrf.mxu0
        %v1856 = vadd.f32 %v1807, %v1855
        %v1857 = vpop.f32.mrf.mxu0
        %v1858 = vadd.f32 %v1809, %v1857
        %1859 = vmatmul.bf16.gmra.mxu0 %v1575
        %v1860 = vpop.f32.mrf.mxu0
        %v1861 = vadd.f32 %v1812, %v1860
        %v1862 = vpop.f32.mrf.mxu0
        %v1863 = vadd.f32 %v1814, %v1862
        %1864 = vmatmul.bf16.gmra.mxu0 %v1578
        %v1865 = vpop.f32.mrf.mxu0
        %v1866 = vadd.f32 %v1817, %v1865
        %v1867 = vpop.f32.mrf.mxu0
        %v1868 = vadd.f32 %v1819, %v1867
        %1869 = vmatmul.bf16.gmra.mxu0 %v1581
        %v1870 = vpop.f32.mrf.mxu0
        %v1871 = vadd.f32 %v1822, %v1870
        %v1872 = vpop.f32.mrf.mxu0
        %v1873 = vadd.f32 %v1824, %v1872
        %1874 = vmatmul.bf16.gmra.mxu0 %v1584
        %v1875 = vpop.f32.mrf.mxu0
        %v1876 = vadd.f32 %v1827, %v1875
        %v1877 = vpop.f32.mrf.mxu0
        %v1878 = vadd.f32 %v1829, %v1877
        %1879 = vdwg.mxu0
        %v1880 = vmax.f32 %v1694, 0.0
        %v1881 = vmax.f32 %v1841, 0.0
        %v1882 = vmax.f32 %v1696, 0.0
        %v1883 = vmax.f32 %v1843, 0.0
        %v1884 = vmax.f32 %v1699, 0.0
        %v1885 = vmax.f32 %v1846, 0.0
        %v1886 = vmax.f32 %v1701, 0.0
        %v1887 = vmax.f32 %v1848, 0.0
        %v1888 = vmax.f32 %v1704, 0.0
        %v1889 = vmax.f32 %v1851, 0.0
        %v1890 = vmax.f32 %v1706, 0.0
        %v1891 = vmax.f32 %v1853, 0.0
        %v1892 = vmax.f32 %v1709, 0.0
        %v1893 = vmax.f32 %v1856, 0.0
        %v1894 = vmax.f32 %v1711, 0.0
        %v1895 = vmax.f32 %v1858, 0.0
        %v1896 = vmax.f32 %v1714, 0.0
        %v1897 = vmax.f32 %v1861, 0.0
        %v1898 = vmax.f32 %v1716, 0.0
        %v1899 = vmax.f32 %v1863, 0.0
        %v1900 = vmax.f32 %v1719, 0.0
        %v1901 = vmax.f32 %v1866, 0.0
        %v1902 = vmax.f32 %v1721, 0.0
        %v1903 = vmax.f32 %v1868, 0.0
        %v1904 = vmax.f32 %v1724, 0.0
        %v1905 = vmax.f32 %v1871, 0.0
        %v1906 = vmax.f32 %v1726, 0.0
        %v1907 = vmax.f32 %v1873, 0.0
        %v1908 = vmax.f32 %v1729, 0.0
        %v1909 = vmax.f32 %v1876, 0.0
        %v1910 = vmax.f32 %v1731, 0.0
        %v1911 = vmax.f32 %v1878, 0.0
        %1912 = vst [vmem:[%s339] sm:$0xff] %v1880
        %1913 = vst [vmem:[%s339 + $0x8] sm:$0xff] %v1881
        %1914 = vst [vmem:[%s339 + $0x10] sm:$0xff] %v1882
        %1915 = vst [vmem:[%s339 + $0x18] sm:$0xff] %v1883
        %1916 = vst [vmem:[%s339 + $0x20] sm:$0xff] %v1884
        %1917 = vst [vmem:[%s339 + $0x28] sm:$0xff] %v1885
        %1918 = vst [vmem:[%s339 + $0x30] sm:$0xff] %v1886
        %1919 = vst [vmem:[%s339 + $0x38] sm:$0xff] %v1887
        %1920 = vst [vmem:[%s339 + $0x40] sm:$0xff] %v1888
        %1921 = vst [vmem:[%s339 + $0x48] sm:$0xff] %v1889
        %1922 = vst [vmem:[%s339 + $0x50] sm:$0xff] %v1890
        %1923 = vst [vmem:[%s339 + $0x58] sm:$0xff] %v1891
        %1924 = vst [vmem:[%s339 + $0x60] sm:$0xff] %v1892
        %1925 = vst [vmem:[%s339 + $0x68] sm:$0xff] %v1893
        %1926 = vst [vmem:[%s339 + $0x70] sm:$0xff] %v1894
        %1927 = vst [vmem:[%s339 + $0x78] sm:$0xff] %v1895
        %1928 = vst [vmem:[%s339 + $0x80] sm:$0xff] %v1896
        %1929 = vst [vmem:[%s339 + $0x88] sm:$0xff] %v1897
        %1930 = vst [vmem:[%s339 + $0x90] sm:$0xff] %v1898
        %1931 = vst [vmem:[%s339 + $0x98] sm:$0xff] %v1899
        %1932 = vst [vmem:[%s339 + $0xa0] sm:$0xff] %v1900
        %1933 = vst [vmem:[%s339 + $0xa8] sm:$0xff] %v1901
        %1934 = vst [vmem:[%s339 + $0xb0] sm:$0xff] %v1902
        %1935 = vst [vmem:[%s339 + $0xb8] sm:$0xff] %v1903
        %1936 = vst [vmem:[%s339 + $0xc0] sm:$0xff] %v1904
        %1937 = vst [vmem:[%s339 + $0xc8] sm:$0xff] %v1905
        %1938 = vst [vmem:[%s339 + $0xd0] sm:$0xff] %v1906
        %1939 = vst [vmem:[%s339 + $0xd8] sm:$0xff] %v1907
        %1940 = vst [vmem:[%s339 + $0xe0] sm:$0xff] %v1908
        %1941 = vst [vmem:[%s339 + $0xe8] sm:$0xff] %v1909
        %1942 = vst [vmem:[%s339 + $0xf0] sm:$0xff] %v1910
        %1943 = vst [vmem:[%s339 + $0xf8] sm:$0xff] %v1911
        %s1944 = sadd.s32 %s1090, 128
        %s1945 = sshra.s32 %s1944, 3
        %s1946 = sand.u32 %s1944, 7
        %s1947 = smul.u32 %s1945, 3
        %s1948 = smul.addr %s1947, 4
        %s1949 = scalar_lea.vmem %s7, %s1948
        %v1950 = vld [vmem:[%s1949] sm:$0xff]
        %v1951 = vld [vmem:[%s1949 + $0x8] sm:$0xf]
        %v1952 = vld [vmem:[%s1949 + $0xc] sm:$0xff]
        %v1953 = vld [vmem:[%s1949 + $0x14] sm:$0xf]
        %v1954 = vld [vmem:[%s1949 + $0x18] sm:$0xff]
        %v1955 = vld [vmem:[%s1949 + $0x20] sm:$0xf]
        %v1956 = vld [vmem:[%s1949 + $0x24] sm:$0xff]
        %v1957 = vld [vmem:[%s1949 + $0x2c] sm:$0xf]
        %v1958 = vld [vmem:[%s1949 + $0x30] sm:$0xff]
        %v1959 = vld [vmem:[%s1949 + $0x38] sm:$0xf]
        %v1960 = vld [vmem:[%s1949 + $0x3c] sm:$0xff]
        %v1961 = vld [vmem:[%s1949 + $0x44] sm:$0xf]
        %v1962 = vld [vmem:[%s1949 + $0x48] sm:$0xff]
        %v1963 = vld [vmem:[%s1949 + $0x50] sm:$0xf]
        %v1964 = vld [vmem:[%s1949 + $0x54] sm:$0xff]
        %v1965 = vld [vmem:[%s1949 + $0x5c] sm:$0xf]
        %v1966 = vld [vmem:[%s1949 + $0x60] sm:$0xff]
        %v1967 = vld [vmem:[%s1949 + $0x68] sm:$0xf]
        %v1968 = vld [vmem:[%s1949 + $0x6c] sm:$0xff]
        %v1969 = vld [vmem:[%s1949 + $0x74] sm:$0xf]
        %v1970 = vld [vmem:[%s1949 + $0x78] sm:$0xff]
        %v1971 = vld [vmem:[%s1949 + $0x80] sm:$0xf]
        %v1972 = vld [vmem:[%s1949 + $0x84] sm:$0xff]
        %v1973 = vld [vmem:[%s1949 + $0x8c] sm:$0xf]
        %v1974 = vld [vmem:[%s1949 + $0x90] sm:$0xff]
        %v1975 = vld [vmem:[%s1949 + $0x98] sm:$0xf]
        %v1976 = vld [vmem:[%s1949 + $0x9c] sm:$0xff]
        %v1977 = vld [vmem:[%s1949 + $0xa4] sm:$0xf]
        %v1978 = vld [vmem:[%s1949 + $0xa8] sm:$0xff]
        %v1979 = vld [vmem:[%s1949 + $0xb0] sm:$0xf]
        %v1980 = vld [vmem:[%s1949 + $0xb4] sm:$0xff]
        %v1981 = vld [vmem:[%s1949 + $0xbc] sm:$0xf]
        %s1982 = scalar_lea.vmem %s8, %s1944
        %v1983 = vld [vmem:[%s1982] sm:$0xff]
        %v1984 = vld [vmem:[%s1982 + $0x8] sm:$0xff]
        %v1985 = vld [vmem:[%s1982 + $0x10] sm:$0xff]
        %v1986 = vld [vmem:[%s1982 + $0x18] sm:$0xff]
        %v1987 = vld [vmem:[%s1982 + $0x20] sm:$0xff]
        %v1988 = vld [vmem:[%s1982 + $0x28] sm:$0xff]
        %v1989 = vld [vmem:[%s1982 + $0x30] sm:$0xff]
        %v1990 = vld [vmem:[%s1982 + $0x38] sm:$0xff]
        %v1991 = vld [vmem:[%s1982 + $0x40] sm:$0xff]
        %v1992 = vld [vmem:[%s1982 + $0x48] sm:$0xff]
        %v1993 = vld [vmem:[%s1982 + $0x50] sm:$0xff]
        %v1994 = vld [vmem:[%s1982 + $0x58] sm:$0xff]
        %v1995 = vld [vmem:[%s1982 + $0x60] sm:$0xff]
        %v1996 = vld [vmem:[%s1982 + $0x68] sm:$0xff]
        %v1997 = vld [vmem:[%s1982 + $0x70] sm:$0xff]
        %v1998 = vld [vmem:[%s1982 + $0x78] sm:$0xff]
        %v1999 = vld [vmem:[#allocation2] sm:$0xff]
        %v2000 = vld [vmem:[#allocation2 + $0x8] sm:$0xff]
        %v2001 = vld [vmem:[#allocation2 + $0x10] sm:$0xff]
        %v2002 = vld [vmem:[#allocation2 + $0x18] sm:$0xff]
        %v2003 = vld [vmem:[#allocation2 + $0x20] sm:$0xff]
        %v2004 = vld [vmem:[#allocation2 + $0x28] sm:$0xff]
        %v2005 = vld [vmem:[#allocation2 + $0x30] sm:$0xff]
        %v2006 = vld [vmem:[#allocation2 + $0x38] sm:$0xff]
        %v2007 = vld [vmem:[#allocation2 + $0x40] sm:$0xff]
        %v2008 = vld [vmem:[#allocation2 + $0x48] sm:$0xff]
        %v2009 = vld [vmem:[#allocation2 + $0x50] sm:$0xff]
        %v2010 = vld [vmem:[#allocation2 + $0x58] sm:$0xff]
        %v2011 = vld [vmem:[#allocation2 + $0x60] sm:$0xff]
        %v2012 = vld [vmem:[#allocation2 + $0x68] sm:$0xff]
        %v2013 = vld [vmem:[#allocation2 + $0x70] sm:$0xff]
        %v2014 = vld [vmem:[#allocation2 + $0x78] sm:$0xff]
        %v2015 = vld [vmem:[#allocation2 + $0x80] sm:$0xff]
        %v2016 = vld [vmem:[#allocation2 + $0x88] sm:$0xff]
        %v2017 = vld [vmem:[#allocation2 + $0x90] sm:$0xff]
        %v2018 = vld [vmem:[#allocation2 + $0x98] sm:$0xff]
        %v2019 = vld [vmem:[#allocation2 + $0xa0] sm:$0xff]
        %v2020 = vld [vmem:[#allocation2 + $0xa8] sm:$0xff]
        %v2021 = vld [vmem:[#allocation2 + $0xb0] sm:$0xff]
        %v2022 = vld [vmem:[#allocation2 + $0xb8] sm:$0xff]
        %v2023 = vld [vmem:[#allocation2 + $0xc0] sm:$0xff]
        %v2024 = vld [vmem:[#allocation2 + $0xc8] sm:$0xff]
        %v2025 = vld [vmem:[#allocation2 + $0xd0] sm:$0xff]
        %v2026 = vld [vmem:[#allocation2 + $0xd8] sm:$0xff]
        %v2027 = vld [vmem:[#allocation2 + $0xe0] sm:$0xff]
        %v2028 = vld [vmem:[#allocation2 + $0xe8] sm:$0xff]
        %v2029 = vld [vmem:[#allocation2 + $0xf0] sm:$0xff]
        %v2030 = vld [vmem:[#allocation2 + $0xf8] sm:$0xff]
        %v2031 = vld [vmem:[#allocation2 + $0x100] sm:$0xff]
        %v2032 = vld [vmem:[#allocation2 + $0x108] sm:$0xff]
        %v2033 = vld [vmem:[#allocation2 + $0x110] sm:$0xff]
        %v2034 = vld [vmem:[#allocation2 + $0x118] sm:$0xff]
        %2036 = vset.pattern.permute.xlu0 0
        %2037 = vperm.xlu0 %2036, %v1983
        %v2038 = vpop.permute.xlu0 %2037
        %2041 = vset.pattern.permute.xlu0 0
        %2042 = vperm.xlu0 %2041, %v1984
        %v2043 = vpop.permute.xlu0 %2042
        %2046 = vset.pattern.permute.xlu0 0
        %2047 = vperm.xlu0 %2046, %v1985
        %v2048 = vpop.permute.xlu0 %2047
        %2051 = vset.pattern.permute.xlu0 0
        %2052 = vperm.xlu0 %2051, %v1986
        %v2053 = vpop.permute.xlu0 %2052
        %2056 = vset.pattern.permute.xlu0 0
        %2057 = vperm.xlu0 %2056, %v1987
        %v2058 = vpop.permute.xlu0 %2057
        %2061 = vset.pattern.permute.xlu0 0
        %2062 = vperm.xlu0 %2061, %v1988
        %v2063 = vpop.permute.xlu0 %2062
        %2066 = vset.pattern.permute.xlu0 0
        %2067 = vperm.xlu0 %2066, %v1989
        %v2068 = vpop.permute.xlu0 %2067
        %2071 = vset.pattern.permute.xlu0 0
        %2072 = vperm.xlu0 %2071, %v1990
        %v2073 = vpop.permute.xlu0 %2072
        %2076 = vset.pattern.permute.xlu0 0
        %2077 = vperm.xlu0 %2076, %v1991
        %v2078 = vpop.permute.xlu0 %2077
        %2081 = vset.pattern.permute.xlu0 0
        %2082 = vperm.xlu0 %2081, %v1992
        %v2083 = vpop.permute.xlu0 %2082
        %2086 = vset.pattern.permute.xlu0 0
        %2087 = vperm.xlu0 %2086, %v1993
        %v2088 = vpop.permute.xlu0 %2087
        %2091 = vset.pattern.permute.xlu0 0
        %2092 = vperm.xlu0 %2091, %v1994
        %v2093 = vpop.permute.xlu0 %2092
        %2096 = vset.pattern.permute.xlu0 0
        %2097 = vperm.xlu0 %2096, %v1995
        %v2098 = vpop.permute.xlu0 %2097
        %2101 = vset.pattern.permute.xlu0 0
        %2102 = vperm.xlu0 %2101, %v1996
        %v2103 = vpop.permute.xlu0 %2102
        %2106 = vset.pattern.permute.xlu0 0
        %2107 = vperm.xlu0 %2106, %v1997
        %v2108 = vpop.permute.xlu0 %2107
        %2111 = vset.pattern.permute.xlu0 0
        %2112 = vperm.xlu0 %2111, %v1998
        %v2113 = vpop.permute.xlu0 %2112
        %v2147 = vunpack.c.l.b16 %v1950
        %v2148 = vunpack.c.h.b16 %v1950
        %v2149 = vunpack.c.l.b16 %v1951
        %v2150 = vunpack.c.l.b16 %v1952
        %v2151 = vunpack.c.h.b16 %v1952
        %v2152 = vunpack.c.l.b16 %v1953
        %v2153 = vunpack.c.l.b16 %v1954
        %v2154 = vunpack.c.h.b16 %v1954
        %v2155 = vunpack.c.l.b16 %v1955
        %v2156 = vunpack.c.l.b16 %v1956
        %v2157 = vunpack.c.h.b16 %v1956
        %v2158 = vunpack.c.l.b16 %v1957
        %v2159 = vunpack.c.l.b16 %v1958
        %v2160 = vunpack.c.h.b16 %v1958
        %v2161 = vunpack.c.l.b16 %v1959
        %v2162 = vunpack.c.l.b16 %v1960
        %v2163 = vunpack.c.h.b16 %v1960
        %v2164 = vunpack.c.l.b16 %v1961
        %v2165 = vunpack.c.l.b16 %v1962
        %v2166 = vunpack.c.h.b16 %v1962
        %v2167 = vunpack.c.l.b16 %v1963
        %v2168 = vunpack.c.l.b16 %v1964
        %v2169 = vunpack.c.h.b16 %v1964
        %v2170 = vunpack.c.l.b16 %v1965
        %v2171 = vunpack.c.l.b16 %v1966
        %v2172 = vunpack.c.h.b16 %v1966
        %v2173 = vunpack.c.l.b16 %v1967
        %v2174 = vunpack.c.l.b16 %v1968
        %v2175 = vunpack.c.h.b16 %v1968
        %v2176 = vunpack.c.l.b16 %v1969
        %v2177 = vunpack.c.l.b16 %v1970
        %v2178 = vunpack.c.h.b16 %v1970
        %v2179 = vunpack.c.l.b16 %v1971
        %v2180 = vunpack.c.l.b16 %v1972
        %v2181 = vunpack.c.h.b16 %v1972
        %v2182 = vunpack.c.l.b16 %v1973
        %v2183 = vunpack.c.l.b16 %v1974
        %v2184 = vunpack.c.h.b16 %v1974
        %v2185 = vunpack.c.l.b16 %v1975
        %v2186 = vunpack.c.l.b16 %v1976
        %v2187 = vunpack.c.h.b16 %v1976
        %v2188 = vunpack.c.l.b16 %v1977
        %v2189 = vunpack.c.l.b16 %v1978
        %v2190 = vunpack.c.h.b16 %v1978
        %v2191 = vunpack.c.l.b16 %v1979
        %v2192 = vunpack.c.l.b16 %v1980
        %v2193 = vunpack.c.h.b16 %v1980
        %v2194 = vunpack.c.l.b16 %v1981
        %v2195 = vpack.c.b16 %v2150, %v2147
        %v2196 = vpack.c.b16 %v2151, %v2148
        %v2197 = vpack.c.b16 %v2152, %v2149
        %v2198 = vpack.c.b16 %v2156, %v2153
        %v2199 = vpack.c.b16 %v2157, %v2154
        %v2200 = vpack.c.b16 %v2158, %v2155
        %v2201 = vpack.c.b16 %v2162, %v2159
        %v2202 = vpack.c.b16 %v2163, %v2160
        %v2203 = vpack.c.b16 %v2164, %v2161
        %v2204 = vpack.c.b16 %v2168, %v2165
        %v2205 = vpack.c.b16 %v2169, %v2166
        %v2206 = vpack.c.b16 %v2170, %v2167
        %v2207 = vpack.c.b16 %v2174, %v2171
        %v2208 = vpack.c.b16 %v2175, %v2172
        %v2209 = vpack.c.b16 %v2176, %v2173
        %v2210 = vpack.c.b16 %v2180, %v2177
        %v2211 = vpack.c.b16 %v2181, %v2178
        %v2212 = vpack.c.b16 %v2182, %v2179
        %v2213 = vpack.c.b16 %v2186, %v2183
        %v2214 = vpack.c.b16 %v2187, %v2184
        %v2215 = vpack.c.b16 %v2188, %v2185
        %v2216 = vpack.c.b16 %v2192, %v2189
        %v2217 = vpack.c.b16 %v2193, %v2190
        %v2218 = vpack.c.b16 %v2194, %v2191
        %v2271 = vunpack.c.l.b16 %v1999
        %v2272 = vunpack.c.h.b16 %v1999
        %v2273 = vunpack.c.l.b16 %v2000
        %v2274 = vunpack.c.h.b16 %v2000
        %v2275 = vunpack.c.l.b16 %v2001
        %v2276 = vunpack.c.h.b16 %v2001
        %v2277 = vunpack.c.l.b16 %v2002
        %v2278 = vunpack.c.h.b16 %v2002
        %v2279 = vunpack.c.l.b16 %v2003
        %v2280 = vunpack.c.h.b16 %v2003
        %v2281 = vunpack.c.l.b16 %v2004
        %v2282 = vunpack.c.h.b16 %v2004
        %v2283 = vunpack.c.l.b16 %v2005
        %v2284 = vunpack.c.h.b16 %v2005
        %v2285 = vunpack.c.l.b16 %v2006
        %v2286 = vunpack.c.h.b16 %v2006
        %v2287 = vunpack.c.l.b16 %v2007
        %v2288 = vunpack.c.h.b16 %v2007
        %v2289 = vunpack.c.l.b16 %v2008
        %v2290 = vunpack.c.h.b16 %v2008
        %v2291 = vunpack.c.l.b16 %v2009
        %v2292 = vunpack.c.h.b16 %v2009
        %v2293 = vunpack.c.l.b16 %v2010
        %v2294 = vunpack.c.h.b16 %v2010
        %v2295 = vunpack.c.l.b16 %v2011
        %v2296 = vunpack.c.h.b16 %v2011
        %v2297 = vunpack.c.l.b16 %v2012
        %v2298 = vunpack.c.h.b16 %v2012
        %v2299 = vunpack.c.l.b16 %v2013
        %v2300 = vunpack.c.h.b16 %v2013
        %v2301 = vunpack.c.l.b16 %v2014
        %v2302 = vunpack.c.h.b16 %v2014
        %v2303 = vunpack.c.l.b16 %v2015
        %v2304 = vunpack.c.h.b16 %v2015
        %v2305 = vunpack.c.l.b16 %v2016
        %v2306 = vunpack.c.h.b16 %v2016
        %v2307 = vunpack.c.l.b16 %v2017
        %v2308 = vunpack.c.h.b16 %v2017
        %v2309 = vunpack.c.l.b16 %v2018
        %v2310 = vunpack.c.h.b16 %v2018
        %v2311 = vunpack.c.l.b16 %v2019
        %v2312 = vunpack.c.h.b16 %v2019
        %v2313 = vunpack.c.l.b16 %v2020
        %v2314 = vunpack.c.h.b16 %v2020
        %v2315 = vunpack.c.l.b16 %v2021
        %v2316 = vunpack.c.h.b16 %v2021
        %v2317 = vunpack.c.l.b16 %v2022
        %v2318 = vunpack.c.h.b16 %v2022
        %v2319 = vunpack.c.l.b16 %v2023
        %v2320 = vunpack.c.h.b16 %v2023
        %v2321 = vunpack.c.l.b16 %v2024
        %v2322 = vunpack.c.h.b16 %v2024
        %v2323 = vunpack.c.l.b16 %v2025
        %v2324 = vunpack.c.h.b16 %v2025
        %v2325 = vunpack.c.l.b16 %v2026
        %v2326 = vunpack.c.h.b16 %v2026
        %v2327 = vunpack.c.l.b16 %v2027
        %v2328 = vunpack.c.h.b16 %v2027
        %v2329 = vunpack.c.l.b16 %v2028
        %v2330 = vunpack.c.h.b16 %v2028
        %v2331 = vunpack.c.l.b16 %v2029
        %v2332 = vunpack.c.h.b16 %v2029
        %v2333 = vunpack.c.l.b16 %v2030
        %v2334 = vunpack.c.h.b16 %v2030
        %v2335 = vunpack.c.l.b16 %v2031
        %v2336 = vunpack.c.h.b16 %v2031
        %v2337 = vunpack.c.l.b16 %v2032
        %v2338 = vunpack.c.h.b16 %v2032
        %v2339 = vunpack.c.l.b16 %v2033
        %v2340 = vunpack.c.h.b16 %v2033
        %v2341 = vunpack.c.l.b16 %v2034
        %v2342 = vunpack.c.h.b16 %v2034
        %v2343 = vpack.c.b16 %v2273, %v2271
        %v2344 = vpack.c.b16 %v2274, %v2272
        %v2345 = vpack.c.b16 %v2277, %v2275
        %v2346 = vpack.c.b16 %v2278, %v2276
        %v2347 = vpack.c.b16 %v2281, %v2279
        %v2348 = vpack.c.b16 %v2282, %v2280
        %v2349 = vpack.c.b16 %v2285, %v2283
        %v2350 = vpack.c.b16 %v2286, %v2284
        %v2351 = vpack.c.b16 %v2289, %v2287
        %v2352 = vpack.c.b16 %v2290, %v2288
        %v2353 = vpack.c.b16 %v2293, %v2291
        %v2354 = vpack.c.b16 %v2294, %v2292
        %v2355 = vpack.c.b16 %v2297, %v2295
        %v2356 = vpack.c.b16 %v2298, %v2296
        %v2357 = vpack.c.b16 %v2301, %v2299
        %v2358 = vpack.c.b16 %v2302, %v2300
        %v2359 = vpack.c.b16 %v2305, %v2303
        %v2360 = vpack.c.b16 %v2306, %v2304
        %v2361 = vpack.c.b16 %v2309, %v2307
        %v2362 = vpack.c.b16 %v2310, %v2308
        %v2363 = vpack.c.b16 %v2313, %v2311
        %v2364 = vpack.c.b16 %v2314, %v2312
        %v2365 = vpack.c.b16 %v2317, %v2315
        %v2366 = vpack.c.b16 %v2318, %v2316
        %v2367 = vpack.c.b16 %v2321, %v2319
        %v2368 = vpack.c.b16 %v2322, %v2320
        %v2369 = vpack.c.b16 %v2325, %v2323
        %v2370 = vpack.c.b16 %v2326, %v2324
        %v2371 = vpack.c.b16 %v2329, %v2327
        %v2372 = vpack.c.b16 %v2330, %v2328
        %v2373 = vpack.c.b16 %v2333, %v2331
        %v2374 = vpack.c.b16 %v2334, %v2332
        %v2375 = vpack.c.b16 %v2337, %v2335
        %v2376 = vpack.c.b16 %v2338, %v2336
        %v2377 = vpack.c.b16 %v2341, %v2339
        %v2378 = vpack.c.b16 %v2342, %v2340
        %v2416 = vsel %vm1561, %v2197, 0
        %v2419 = vsel %vm1561, %v2200, 0
        %v2422 = vsel %vm1561, %v2203, 0
        %v2425 = vsel %vm1561, %v2206, 0
        %v2428 = vsel %vm1561, %v2209, 0
        %v2431 = vsel %vm1561, %v2212, 0
        %v2434 = vsel %vm1561, %v2215, 0
        %v2437 = vsel %vm1561, %v2218, 0
        %2439 = vmatpush.bf16.msra.mxu0 %v2357
        %2440 = vmatpush.bf16.msra.mxu0 %v2355
        %2441 = vmatpush.bf16.msra.mxu0 %v2353
        %2442 = vmatpush.bf16.msra.mxu0 %v2351
        %2443 = vmatpush.bf16.msra.mxu0 %v2349
        %2444 = vmatpush.bf16.msra.mxu0 %v2347
        %2445 = vmatpush.bf16.msra.mxu0 %v2345
        %2446 = vmatpush.bf16.msra.mxu0 %v2343
        %2447 = vmatmul.bf16.gmra.mxu0 %v2195
        %v2448 = vpop.f32.mrf.mxu0
        %v2449 = vadd.f32 %v2038, %v2448
        %v2450 = vpop.f32.mrf.mxu0
        %v2451 = vadd.f32 %v2043, %v2450
        %2452 = vmatmul.bf16.gmra.mxu0 %v2198
        %v2453 = vpop.f32.mrf.mxu0
        %v2454 = vadd.f32 %v2048, %v2453
        %v2455 = vpop.f32.mrf.mxu0
        %v2456 = vadd.f32 %v2053, %v2455
        %2457 = vmatmul.bf16.gmra.mxu0 %v2201
        %v2458 = vpop.f32.mrf.mxu0
        %v2459 = vadd.f32 %v2058, %v2458
        %v2460 = vpop.f32.mrf.mxu0
        %v2461 = vadd.f32 %v2063, %v2460
        %2462 = vmatmul.bf16.gmra.mxu0 %v2204
        %v2463 = vpop.f32.mrf.mxu0
        %v2464 = vadd.f32 %v2068, %v2463
        %v2465 = vpop.f32.mrf.mxu0
        %v2466 = vadd.f32 %v2073, %v2465
        %2467 = vmatmul.bf16.gmra.mxu0 %v2207
        %v2468 = vpop.f32.mrf.mxu0
        %v2469 = vadd.f32 %v2078, %v2468
        %v2470 = vpop.f32.mrf.mxu0
        %v2471 = vadd.f32 %v2083, %v2470
        %2472 = vmatmul.bf16.gmra.mxu0 %v2210
        %v2473 = vpop.f32.mrf.mxu0
        %v2474 = vadd.f32 %v2088, %v2473
        %v2475 = vpop.f32.mrf.mxu0
        %v2476 = vadd.f32 %v2093, %v2475
        %2477 = vmatmul.bf16.gmra.mxu0 %v2213
        %v2478 = vpop.f32.mrf.mxu0
        %v2479 = vadd.f32 %v2098, %v2478
        %v2480 = vpop.f32.mrf.mxu0
        %v2481 = vadd.f32 %v2103, %v2480
        %2482 = vmatmul.bf16.gmra.mxu0 %v2216
        %v2483 = vpop.f32.mrf.mxu0
        %v2484 = vadd.f32 %v2108, %v2483
        %v2485 = vpop.f32.mrf.mxu0
        %v2486 = vadd.f32 %v2113, %v2485
        %2487 = vdwg.mxu0
        %2488 = vmatpush.bf16.msra.mxu0 %v2373
        %2489 = vmatpush.bf16.msra.mxu0 %v2371
        %2490 = vmatpush.bf16.msra.mxu0 %v2369
        %2491 = vmatpush.bf16.msra.mxu0 %v2367
        %2492 = vmatpush.bf16.msra.mxu0 %v2365
        %2493 = vmatpush.bf16.msra.mxu0 %v2363
        %2494 = vmatpush.bf16.msra.mxu0 %v2361
        %2495 = vmatpush.bf16.msra.mxu0 %v2359
        %2496 = vmatmul.bf16.gmra.mxu0 %v2196
        %v2497 = vpop.f32.mrf.mxu0
        %v2498 = vadd.f32 %v2449, %v2497
        %v2499 = vpop.f32.mrf.mxu0
        %v2500 = vadd.f32 %v2451, %v2499
        %2501 = vmatmul.bf16.gmra.mxu0 %v2199
        %v2502 = vpop.f32.mrf.mxu0
        %v2503 = vadd.f32 %v2454, %v2502
        %v2504 = vpop.f32.mrf.mxu0
        %v2505 = vadd.f32 %v2456, %v2504
        %2506 = vmatmul.bf16.gmra.mxu0 %v2202
        %v2507 = vpop.f32.mrf.mxu0
        %v2508 = vadd.f32 %v2459, %v2507
        %v2509 = vpop.f32.mrf.mxu0
        %v2510 = vadd.f32 %v2461, %v2509
        %2511 = vmatmul.bf16.gmra.mxu0 %v2205
        %v2512 = vpop.f32.mrf.mxu0
        %v2513 = vadd.f32 %v2464, %v2512
        %v2514 = vpop.f32.mrf.mxu0
        %v2515 = vadd.f32 %v2466, %v2514
        %2516 = vmatmul.bf16.gmra.mxu0 %v2208
        %v2517 = vpop.f32.mrf.mxu0
        %v2518 = vadd.f32 %v2469, %v2517
        %v2519 = vpop.f32.mrf.mxu0
        %v2520 = vadd.f32 %v2471, %v2519
        %2521 = vmatmul.bf16.gmra.mxu0 %v2211
        %v2522 = vpop.f32.mrf.mxu0
        %v2523 = vadd.f32 %v2474, %v2522
        %v2524 = vpop.f32.mrf.mxu0
        %v2525 = vadd.f32 %v2476, %v2524
        %2526 = vmatmul.bf16.gmra.mxu0 %v2214
        %v2527 = vpop.f32.mrf.mxu0
        %v2528 = vadd.f32 %v2479, %v2527
        %v2529 = vpop.f32.mrf.mxu0
        %v2530 = vadd.f32 %v2481, %v2529
        %2531 = vmatmul.bf16.gmra.mxu0 %v2217
        %v2532 = vpop.f32.mrf.mxu0
        %v2533 = vadd.f32 %v2484, %v2532
        %v2534 = vpop.f32.mrf.mxu0
        %v2535 = vadd.f32 %v2486, %v2534
        %2536 = vdwg.mxu0
        %2537 = vmatpush.bf16.msra.mxu0 0
        %2538 = vmatpush.bf16.msra.mxu0 0
        %2539 = vmatpush.bf16.msra.mxu0 0
        %2540 = vmatpush.bf16.msra.mxu0 0
        %2541 = vmatpush.bf16.msra.mxu0 0
        %2542 = vmatpush.bf16.msra.mxu0 0
        %2543 = vmatpush.bf16.msra.mxu0 %v2377
        %2544 = vmatpush.bf16.msra.mxu0 %v2375
        %2545 = vmatmul.bf16.gmra.mxu0 %v2416
        %v2546 = vpop.f32.mrf.mxu0
        %v2547 = vadd.f32 %v2498, %v2546
        %v2548 = vpop.f32.mrf.mxu0
        %v2549 = vadd.f32 %v2500, %v2548
        %2550 = vmatmul.bf16.gmra.mxu0 %v2419
        %v2551 = vpop.f32.mrf.mxu0
        %v2552 = vadd.f32 %v2503, %v2551
        %v2553 = vpop.f32.mrf.mxu0
        %v2554 = vadd.f32 %v2505, %v2553
        %2555 = vmatmul.bf16.gmra.mxu0 %v2422
        %v2556 = vpop.f32.mrf.mxu0
        %v2557 = vadd.f32 %v2508, %v2556
        %v2558 = vpop.f32.mrf.mxu0
        %v2559 = vadd.f32 %v2510, %v2558
        %2560 = vmatmul.bf16.gmra.mxu0 %v2425
        %v2561 = vpop.f32.mrf.mxu0
        %v2562 = vadd.f32 %v2513, %v2561
        %v2563 = vpop.f32.mrf.mxu0
        %v2564 = vadd.f32 %v2515, %v2563
        %2565 = vmatmul.bf16.gmra.mxu0 %v2428
        %v2566 = vpop.f32.mrf.mxu0
        %v2567 = vadd.f32 %v2518, %v2566
        %v2568 = vpop.f32.mrf.mxu0
        %v2569 = vadd.f32 %v2520, %v2568
        %2570 = vmatmul.bf16.gmra.mxu0 %v2431
        %v2571 = vpop.f32.mrf.mxu0
        %v2572 = vadd.f32 %v2523, %v2571
        %v2573 = vpop.f32.mrf.mxu0
        %v2574 = vadd.f32 %v2525, %v2573
        %2575 = vmatmul.bf16.gmra.mxu0 %v2434
        %v2576 = vpop.f32.mrf.mxu0
        %v2577 = vadd.f32 %v2528, %v2576
        %v2578 = vpop.f32.mrf.mxu0
        %v2579 = vadd.f32 %v2530, %v2578
        %2580 = vmatmul.bf16.gmra.mxu0 %v2437
        %v2581 = vpop.f32.mrf.mxu0
        %v2582 = vadd.f32 %v2533, %v2581
        %v2583 = vpop.f32.mrf.mxu0
        %v2584 = vadd.f32 %v2535, %v2583
        %2585 = vdwg.mxu0
        %2586 = vmatpush.bf16.msra.mxu0 %v2358
        %2587 = vmatpush.bf16.msra.mxu0 %v2356
        %2588 = vmatpush.bf16.msra.mxu0 %v2354
        %2589 = vmatpush.bf16.msra.mxu0 %v2352
        %2590 = vmatpush.bf16.msra.mxu0 %v2350
        %2591 = vmatpush.bf16.msra.mxu0 %v2348
        %2592 = vmatpush.bf16.msra.mxu0 %v2346
        %2593 = vmatpush.bf16.msra.mxu0 %v2344
        %2594 = vmatmul.bf16.gmra.mxu0 %v2195
        %v2595 = vpop.f32.mrf.mxu0
        %v2596 = vadd.f32 %v2038, %v2595
        %v2597 = vpop.f32.mrf.mxu0
        %v2598 = vadd.f32 %v2043, %v2597
        %2599 = vmatmul.bf16.gmra.mxu0 %v2198
        %v2600 = vpop.f32.mrf.mxu0
        %v2601 = vadd.f32 %v2048, %v2600
        %v2602 = vpop.f32.mrf.mxu0
        %v2603 = vadd.f32 %v2053, %v2602
        %2604 = vmatmul.bf16.gmra.mxu0 %v2201
        %v2605 = vpop.f32.mrf.mxu0
        %v2606 = vadd.f32 %v2058, %v2605
        %v2607 = vpop.f32.mrf.mxu0
        %v2608 = vadd.f32 %v2063, %v2607
        %2609 = vmatmul.bf16.gmra.mxu0 %v2204
        %v2610 = vpop.f32.mrf.mxu0
        %v2611 = vadd.f32 %v2068, %v2610
        %v2612 = vpop.f32.mrf.mxu0
        %v2613 = vadd.f32 %v2073, %v2612
        %2614 = vmatmul.bf16.gmra.mxu0 %v2207
        %v2615 = vpop.f32.mrf.mxu0
        %v2616 = vadd.f32 %v2078, %v2615
        %v2617 = vpop.f32.mrf.mxu0
        %v2618 = vadd.f32 %v2083, %v2617
        %2619 = vmatmul.bf16.gmra.mxu0 %v2210
        %v2620 = vpop.f32.mrf.mxu0
        %v2621 = vadd.f32 %v2088, %v2620
        %v2622 = vpop.f32.mrf.mxu0
        %v2623 = vadd.f32 %v2093, %v2622
        %2624 = vmatmul.bf16.gmra.mxu0 %v2213
        %v2625 = vpop.f32.mrf.mxu0
        %v2626 = vadd.f32 %v2098, %v2625
        %v2627 = vpop.f32.mrf.mxu0
        %v2628 = vadd.f32 %v2103, %v2627
        %2629 = vmatmul.bf16.gmra.mxu0 %v2216
        %v2630 = vpop.f32.mrf.mxu0
        %v2631 = vadd.f32 %v2108, %v2630
        %v2632 = vpop.f32.mrf.mxu0
        %v2633 = vadd.f32 %v2113, %v2632
        %2634 = vdwg.mxu0
        %2635 = vmatpush.bf16.msra.mxu0 %v2374
        %2636 = vmatpush.bf16.msra.mxu0 %v2372
        %2637 = vmatpush.bf16.msra.mxu0 %v2370
        %2638 = vmatpush.bf16.msra.mxu0 %v2368
        %2639 = vmatpush.bf16.msra.mxu0 %v2366
        %2640 = vmatpush.bf16.msra.mxu0 %v2364
        %2641 = vmatpush.bf16.msra.mxu0 %v2362
        %2642 = vmatpush.bf16.msra.mxu0 %v2360
        %2643 = vmatmul.bf16.gmra.mxu0 %v2196
        %v2644 = vpop.f32.mrf.mxu0
        %v2645 = vadd.f32 %v2596, %v2644
        %v2646 = vpop.f32.mrf.mxu0
        %v2647 = vadd.f32 %v2598, %v2646
        %2648 = vmatmul.bf16.gmra.mxu0 %v2199
        %v2649 = vpop.f32.mrf.mxu0
        %v2650 = vadd.f32 %v2601, %v2649
        %v2651 = vpop.f32.mrf.mxu0
        %v2652 = vadd.f32 %v2603, %v2651
        %2653 = vmatmul.bf16.gmra.mxu0 %v2202
        %v2654 = vpop.f32.mrf.mxu0
        %v2655 = vadd.f32 %v2606, %v2654
        %v2656 = vpop.f32.mrf.mxu0
        %v2657 = vadd.f32 %v2608, %v2656
        %2658 = vmatmul.bf16.gmra.mxu0 %v2205
        %v2659 = vpop.f32.mrf.mxu0
        %v2660 = vadd.f32 %v2611, %v2659
        %v2661 = vpop.f32.mrf.mxu0
        %v2662 = vadd.f32 %v2613, %v2661
        %2663 = vmatmul.bf16.gmra.mxu0 %v2208
        %v2664 = vpop.f32.mrf.mxu0
        %v2665 = vadd.f32 %v2616, %v2664
        %v2666 = vpop.f32.mrf.mxu0
        %v2667 = vadd.f32 %v2618, %v2666
        %2668 = vmatmul.bf16.gmra.mxu0 %v2211
        %v2669 = vpop.f32.mrf.mxu0
        %v2670 = vadd.f32 %v2621, %v2669
        %v2671 = vpop.f32.mrf.mxu0
        %v2672 = vadd.f32 %v2623, %v2671
        %2673 = vmatmul.bf16.gmra.mxu0 %v2214
        %v2674 = vpop.f32.mrf.mxu0
        %v2675 = vadd.f32 %v2626, %v2674
        %v2676 = vpop.f32.mrf.mxu0
        %v2677 = vadd.f32 %v2628, %v2676
        %2678 = vmatmul.bf16.gmra.mxu0 %v2217
        %v2679 = vpop.f32.mrf.mxu0
        %v2680 = vadd.f32 %v2631, %v2679
        %v2681 = vpop.f32.mrf.mxu0
        %v2682 = vadd.f32 %v2633, %v2681
        %2683 = vdwg.mxu0
        %2684 = vmatpush.bf16.msra.mxu0 0
        %2685 = vmatpush.bf16.msra.mxu0 0
        %2686 = vmatpush.bf16.msra.mxu0 0
        %2687 = vmatpush.bf16.msra.mxu0 0
        %2688 = vmatpush.bf16.msra.mxu0 0
        %2689 = vmatpush.bf16.msra.mxu0 0
        %2690 = vmatpush.bf16.msra.mxu0 %v2378
        %2691 = vmatpush.bf16.msra.mxu0 %v2376
        %2692 = vmatmul.bf16.gmra.mxu0 %v2416
        %v2693 = vpop.f32.mrf.mxu0
        %v2694 = vadd.f32 %v2645, %v2693
        %v2695 = vpop.f32.mrf.mxu0
        %v2696 = vadd.f32 %v2647, %v2695
        %2697 = vmatmul.bf16.gmra.mxu0 %v2419
        %v2698 = vpop.f32.mrf.mxu0
        %v2699 = vadd.f32 %v2650, %v2698
        %v2700 = vpop.f32.mrf.mxu0
        %v2701 = vadd.f32 %v2652, %v2700
        %2702 = vmatmul.bf16.gmra.mxu0 %v2422
        %v2703 = vpop.f32.mrf.mxu0
        %v2704 = vadd.f32 %v2655, %v2703
        %v2705 = vpop.f32.mrf.mxu0
        %v2706 = vadd.f32 %v2657, %v2705
        %2707 = vmatmul.bf16.gmra.mxu0 %v2425
        %v2708 = vpop.f32.mrf.mxu0
        %v2709 = vadd.f32 %v2660, %v2708
        %v2710 = vpop.f32.mrf.mxu0
        %v2711 = vadd.f32 %v2662, %v2710
        %2712 = vmatmul.bf16.gmra.mxu0 %v2428
        %v2713 = vpop.f32.mrf.mxu0
        %v2714 = vadd.f32 %v2665, %v2713
        %v2715 = vpop.f32.mrf.mxu0
        %v2716 = vadd.f32 %v2667, %v2715
        %2717 = vmatmul.bf16.gmra.mxu0 %v2431
        %v2718 = vpop.f32.mrf.mxu0
        %v2719 = vadd.f32 %v2670, %v2718
        %v2720 = vpop.f32.mrf.mxu0
        %v2721 = vadd.f32 %v2672, %v2720
        %2722 = vmatmul.bf16.gmra.mxu0 %v2434
        %v2723 = vpop.f32.mrf.mxu0
        %v2724 = vadd.f32 %v2675, %v2723
        %v2725 = vpop.f32.mrf.mxu0
        %v2726 = vadd.f32 %v2677, %v2725
        %2727 = vmatmul.bf16.gmra.mxu0 %v2437
        %v2728 = vpop.f32.mrf.mxu0
        %v2729 = vadd.f32 %v2680, %v2728
        %v2730 = vpop.f32.mrf.mxu0
        %v2731 = vadd.f32 %v2682, %v2730
        %2732 = vdwg.mxu0
        %v2733 = vmax.f32 %v2547, 0.0
        %v2734 = vmax.f32 %v2694, 0.0
        %v2735 = vmax.f32 %v2549, 0.0
        %v2736 = vmax.f32 %v2696, 0.0
        %v2737 = vmax.f32 %v2552, 0.0
        %v2738 = vmax.f32 %v2699, 0.0
        %v2739 = vmax.f32 %v2554, 0.0
        %v2740 = vmax.f32 %v2701, 0.0
        %v2741 = vmax.f32 %v2557, 0.0
        %v2742 = vmax.f32 %v2704, 0.0
        %v2743 = vmax.f32 %v2559, 0.0
        %v2744 = vmax.f32 %v2706, 0.0
        %v2745 = vmax.f32 %v2562, 0.0
        %v2746 = vmax.f32 %v2709, 0.0
        %v2747 = vmax.f32 %v2564, 0.0
        %v2748 = vmax.f32 %v2711, 0.0
        %v2749 = vmax.f32 %v2567, 0.0
        %v2750 = vmax.f32 %v2714, 0.0
        %v2751 = vmax.f32 %v2569, 0.0
        %v2752 = vmax.f32 %v2716, 0.0
        %v2753 = vmax.f32 %v2572, 0.0
        %v2754 = vmax.f32 %v2719, 0.0
        %v2755 = vmax.f32 %v2574, 0.0
        %v2756 = vmax.f32 %v2721, 0.0
        %v2757 = vmax.f32 %v2577, 0.0
        %v2758 = vmax.f32 %v2724, 0.0
        %v2759 = vmax.f32 %v2579, 0.0
        %v2760 = vmax.f32 %v2726, 0.0
        %v2761 = vmax.f32 %v2582, 0.0
        %v2762 = vmax.f32 %v2729, 0.0
        %v2763 = vmax.f32 %v2584, 0.0
        %v2764 = vmax.f32 %v2731, 0.0
        %2765 = vst [vmem:[%s339 + $0x100] sm:$0xff] %v2733
        %2766 = vst [vmem:[%s339 + $0x108] sm:$0xff] %v2734
        %2767 = vst [vmem:[%s339 + $0x110] sm:$0xff] %v2735
        %2768 = vst [vmem:[%s339 + $0x118] sm:$0xff] %v2736
        %2769 = vst [vmem:[%s339 + $0x120] sm:$0xff] %v2737
        %2770 = vst [vmem:[%s339 + $0x128] sm:$0xff] %v2738
        %2771 = vst [vmem:[%s339 + $0x130] sm:$0xff] %v2739
        %2772 = vst [vmem:[%s339 + $0x138] sm:$0xff] %v2740
        %2773 = vst [vmem:[%s339 + $0x140] sm:$0xff] %v2741
        %2774 = vst [vmem:[%s339 + $0x148] sm:$0xff] %v2742
        %2775 = vst [vmem:[%s339 + $0x150] sm:$0xff] %v2743
        %2776 = vst [vmem:[%s339 + $0x158] sm:$0xff] %v2744
        %2777 = vst [vmem:[%s339 + $0x160] sm:$0xff] %v2745
        %2778 = vst [vmem:[%s339 + $0x168] sm:$0xff] %v2746
        %2779 = vst [vmem:[%s339 + $0x170] sm:$0xff] %v2747
        %2780 = vst [vmem:[%s339 + $0x178] sm:$0xff] %v2748
        %2781 = vst [vmem:[%s339 + $0x180] sm:$0xff] %v2749
        %2782 = vst [vmem:[%s339 + $0x188] sm:$0xff] %v2750
        %2783 = vst [vmem:[%s339 + $0x190] sm:$0xff] %v2751
        %2784 = vst [vmem:[%s339 + $0x198] sm:$0xff] %v2752
        %2785 = vst [vmem:[%s339 + $0x1a0] sm:$0xff] %v2753
        %2786 = vst [vmem:[%s339 + $0x1a8] sm:$0xff] %v2754
        %2787 = vst [vmem:[%s339 + $0x1b0] sm:$0xff] %v2755
        %2788 = vst [vmem:[%s339 + $0x1b8] sm:$0xff] %v2756
        %2789 = vst [vmem:[%s339 + $0x1c0] sm:$0xff] %v2757
        %2790 = vst [vmem:[%s339 + $0x1c8] sm:$0xff] %v2758
        %2791 = vst [vmem:[%s339 + $0x1d0] sm:$0xff] %v2759
        %2792 = vst [vmem:[%s339 + $0x1d8] sm:$0xff] %v2760
        %2793 = vst [vmem:[%s339 + $0x1e0] sm:$0xff] %v2761
        %2794 = vst [vmem:[%s339 + $0x1e8] sm:$0xff] %v2762
        %2795 = vst [vmem:[%s339 + $0x1f0] sm:$0xff] %v2763
        %2796 = vst [vmem:[%s339 + $0x1f8] sm:$0xff] %v2764
        %s2797 = sand.u32 %s239, 1
        %s2798 = scalar_lea.sflag [#allocation4], %s2797
        %s2799 = sand.u32 %s239, 1
        %s2800 = smul.addr %s2799, 512
        %s2801 = scalar_lea.vmem [#allocation3], %s2800
        // Predicated region
        $region61: #{tpu_custom_call.1} parent=55 // pred_check
          %p2802 = pneg %p249
        $region62: #{tpu_custom_call.1} parent=55 // pred_check_branch
          %2804 = sbr.rel (%p2802) target = $region64
        $region63: #{tpu_custom_call.1} parent=55 // pred_region
          %s2805 = smul.u32 32, %s28
          %2807 = vsyncadd %s2798, 0
          %s2808 = smul.addr %s2805, 2
          %s2809 = smul.addr %s27, 128
          %s2810 = sadd.s32 %s2808, %s2809
          %s2811 = smul.addr %s2810, 8
          %s2812 = scalar_lea.hbm %s9, %s2811
          %s2813 = sshll.u32 %s2801, 4
          %s2814 = int_to_ptr.vmem [resolvable:$true] %s2813
          %s2815 = sshll.u32 %s2812, 4
          %s2816 = int_to_ptr.hbm [resolvable:$true] %s2815
          %2821 = dma.vmem_to_hbm [thread:$0]  %s2814, 8192, %s2816, %s2798, 256, 256, 16
        $region64: #{tpu_custom_call.1} parent=55 // pred_fallthru
          _
      $region56: #{tpu_custom_call.1} parent=5 // pred_fallthru
        _
      %p2822 = scmp.le.s32.totalorder 2, %s18
      // Predicated region
      $region65: #{tpu_custom_call.1} parent=5 // pred_check
        %p2823 = pneg %p2822
      $region66: #{tpu_custom_call.1} parent=5 // pred_check_branch
        %2825 = sbr.rel (%p2823) target = $region68
      $region67: #{tpu_custom_call.1} parent=5 // pred_region
        %s2826 = ssub.s32 %s18, 2
        // Predicated region
        $region69: #{tpu_custom_call.1} parent=67 // pred_check
          %p2827 = pneg %p255
        $region70: #{tpu_custom_call.1} parent=67 // pred_check_branch
          %2829 = sbr.rel (%p2827) target = $region72
        $region71: #{tpu_custom_call.1} parent=67 // pred_region
          %s2830 = sand.u32 %s240, 1
          %s2831 = scalar_lea.sflag [#allocation4], %s2830
          %s2832 = sand.u32 %s240, 1
          %s2833 = smul.addr %s2832, 512
          %s2834 = scalar_lea.vmem [#allocation3], %s2833
          %2836 = dma.done %s2831, 8192
        $region72: #{tpu_custom_call.1} parent=67 // pred_fallthru
          _
      $region68: #{tpu_custom_call.1} parent=5 // pred_fallthru
        _
    $region6: #{tpu_custom_call.1} parent=1 // loop_footer
      %s22 = sadd.s32 1, %s18
    $region7: #{tpu_custom_call.1} parent=1 // loop_footer_branch
      %17 = sbr.rel target = $region3
    $region8: #{tpu_custom_call.1} parent=1 // loop_exit
      _
    %2837 = vsyncpa [#allocation4], 1
    %s2838 = scalar_lea.sflag [#allocation4], 1
    %2839 = vsyncpa %s2838, 1

</llo_original>
